<compile_context>
chip_gen: v7x
topology: tpu7x:2x2x1
jax: 0.10.0
libtpu: 0.0.40
codegen_flags: <defaults>
</compile_context>

<pallas_src>
import functools

import jax
import jax.numpy as jnp
from jax.experimental import pallas as pl
from jax.experimental.pallas import tpu as pltpu

HIDDEN = 768
TAG_CLASSES = 74
CLASS_PAD = 128          # lane-dense padded class dimension
NEG_INF = -1e32          # row mask bias (matches the PyTorch module)
PAD_CLASS_BIAS = -1e30   # finite large-negative bias for padded class columns
TILE_N_MAX = 2048        # rows per grid step (v6e/v7x); use 1024 on v5e


def _round_up(x, m):
    return (x + m - 1) // m * m


def _bert_head_kernel(h_ref, w1_ref, b1_ref, w2_ref, b2_ref, packed_ref,
                      prob_ref, nll_ref):
    # h:  (T, 768) f32        w1: (768, 768) bf16      b1: (1, 768) f32
    # w2: (768, 128) bf16     b2: (1, 128) f32 (padded cols = -1e30)
    # packed: (T, 1) i32 = (safe_id << 2) | (valid << 1) | mask_bit
    h = h_ref[...].astype(jnp.bfloat16)            # in-kernel cast (VPU, hidden under MXU)

    # IntentAugment MLP: Linear -> LeakyReLU(0.2) -> Linear (bf16 MXU, f32 acc)
    z = jnp.dot(h, w1_ref[...], preferred_element_type=jnp.float32) + b1_ref[...]
    z = jnp.where(z > 0, z, 0.2 * z)               # f32 VPU
    logits = jnp.dot(z.astype(jnp.bfloat16), w2_ref[...],
                     preferred_element_type=jnp.float32) + b2_ref[...]

    packed = packed_ref[...]                       # (T, 1) i32
    mask = jnp.bitwise_and(packed, 1).astype(jnp.float32)
    valid = jnp.bitwise_and(jnp.right_shift(packed, 1), 1)
    ids = jnp.right_shift(packed, 2)

    # logits += (1 - tag_mask) * -1e32   (broadcast over classes)
    logits = logits + (1.0 - mask) * NEG_INF

    # softmax over the lane-dense 128-wide class dim; bf16 writeback
    m = jnp.max(logits, axis=-1, keepdims=True)
    e = jnp.exp(logits - m)
    s = jnp.sum(e, axis=-1, keepdims=True)
    prob_ref[...] = (e * pl.reciprocal(s, approx=True)).astype(prob_ref.dtype)

    # CrossEntropyLoss(ignore_index) per-row terms (reduced outside so the
    # grid axis stays "parallel").  Target logit taken directly from `logits`
    # -- no full (T,128) log_probs temporary.
    class_idx = jax.lax.broadcasted_iota(jnp.int32, logits.shape, 1)
    onehot = (class_idx == ids).astype(jnp.float32)            # (T, 128)
    tgt_logit = jnp.sum(logits * onehot, axis=-1, keepdims=True)   # (T, 1)
    nll = -((tgt_logit - m) - jnp.log(s))
    # where() (not multiply) so garbage rows in a partial last tile can never
    # poison the loss with NaN/Inf (their stores are clipped anyway).
    nll_ref[...] = jnp.where(valid > 0, nll, 0.0)


@functools.partial(jax.jit, static_argnames=("ignore_index", "tile_n_max"))
def bert_based_forward(last_hidden, tag_mask, tag_ids, params,
                       ignore_index=-1, tile_n_max=TILE_N_MAX):
    """Returns (prob [B,S,C] bf16, loss scalar), matching BertBasedModel.forward."""
    B, S, H = last_hidden.shape
    C = params["w2"].shape[1]
    c_pad = _round_up(max(C, CLASS_PAD), 128)
    N = B * S
    tile_n = min(tile_n_max, _round_up(N, 16))     # 16-row align (bf16 sublanes)
    num_tiles = pl.cdiv(N, tile_n)                 # partial last block allowed

    # Activations: flatten (B,S,H)->(N,H) (free); NO pad / NO cast pass here.
    h2 = last_hidden.reshape(N, H).astype(jnp.float32)

    # Weights: bf16 MXU operands, f32 biases; pad classes to 128 lanes with a
    # finite large-negative bias so padded classes vanish in softmax.
    w1 = params["w1"].astype(jnp.bfloat16)
    b1 = params["b1"].astype(jnp.float32).reshape(1, H)
    w2 = jnp.pad(params["w2"], ((0, 0), (0, c_pad - C))).astype(jnp.bfloat16)
    b2 = jnp.pad(params["b2"].astype(jnp.float32).reshape(1, C),
                 ((0, 0), (0, c_pad - C)), constant_values=PAD_CLASS_BIAS)

    # Pack tag_mask / tag_ids into one int32 stream (binary mask assumed).
    ids_flat = tag_ids.reshape(N).astype(jnp.int32)
    mask_bit = (tag_mask.reshape(N) != 0).astype(jnp.int32)
    valid_bit = (ids_flat != ignore_index).astype(jnp.int32)
    safe_ids = jnp.where(valid_bit == 1, ids_flat, 0)
    packed = ((safe_ids << 2) | (valid_bit << 1) | mask_bit).reshape(N, 1)

    cost = pl.CostEstimate(
        flops=2 * N * H * (H + c_pad),
        transcendentals=N * c_pad,
        bytes_accessed=(N * H * 4 + w1.size * 2 + w2.size * 2
                        + b1.size * 4 + b2.size * 4
                        + N * c_pad * 2 + N * 4 + N * 4),
    )

    resident = pl.Buffered(1)   # single-buffered residents (constant index_map)
    prob, nll = pl.pallas_call(
        _bert_head_kernel,
        grid=(num_tiles,),
        in_specs=[
            pl.BlockSpec((tile_n, H), lambda i: (i, 0)),                 # h (f32)
            pl.BlockSpec((H, H), lambda i: (0, 0), pipeline_mode=resident),      # w1
            pl.BlockSpec((1, H), lambda i: (0, 0), pipeline_mode=resident),      # b1
            pl.BlockSpec((H, c_pad), lambda i: (0, 0), pipeline_mode=resident),  # w2
            pl.BlockSpec((1, c_pad), lambda i: (0, 0), pipeline_mode=resident),  # b2
            pl.BlockSpec((tile_n, 1), lambda i: (i, 0)),                 # packed mask/ids
        ],
        out_specs=(
            pl.BlockSpec((tile_n, c_pad), lambda i: (i, 0)),             # prob (bf16)
            pl.BlockSpec((tile_n, 1), lambda i: (i, 0)),                 # per-row nll
        ),
        out_shape=(
            jax.ShapeDtypeStruct((N, c_pad), jnp.bfloat16),
            jax.ShapeDtypeStruct((N, 1), jnp.float32),
        ),
        compiler_params=pltpu.CompilerParams(
            dimension_semantics=("parallel",),
            vmem_limit_bytes=64 * 1024 * 1024),
        cost_estimate=cost,
    )(h2, w1, b1, w2, b2, packed)

    # Valid-target count computed here (no extra kernel output stream needed).
    cnt = jnp.sum(valid_bit).astype(jnp.float32)
    loss = jnp.sum(nll) / jnp.maximum(cnt, 1.0)
    # prob stays bf16 (decode() only argmaxes it); slice off padded classes.
    return prob[:, :C].reshape(B, S, C), loss


def init_params(key, hidden=HIDDEN, tag_classes=TAG_CLASSES):
    k1, k2, k3, k4 = jax.random.split(key, 4)
    scale = 0.02
    return {
        "w1": scale * jax.random.normal(k1, (hidden, hidden), jnp.float32),
        "b1": scale * jax.random.normal(k2, (1, hidden), jnp.float32),
        "w2": scale * jax.random.normal(k3, (hidden, tag_classes), jnp.float32),
        "b2": scale * jax.random.normal(k4, (1, tag_classes), jnp.float32),
    }


def _reference(last_hidden, tag_mask, tag_ids, params, ignore_index=-1):
    # Pure-JAX reference with the same bf16-operand / f32-accumulate matmuls.
    h = last_hidden.astype(jnp.bfloat16)
    w1 = params["w1"].astype(jnp.bfloat16)
    w2 = params["w2"].astype(jnp.bfloat16)
    z = jnp.dot(h, w1, preferred_element_type=jnp.float32) + params["b1"][0]
    z = jnp.where(z > 0, z, 0.2 * z)
    logits = jnp.dot(z.astype(jnp.bfloat16), w2,
                     preferred_element_type=jnp.float32) + params["b2"][0]
    logits = logits + (1.0 - tag_mask)[..., None] * NEG_INF
    prob = jax.nn.softmax(logits, axis=-1)
    lp = jax.nn.log_softmax(logits, axis=-1)
    flat_lp = lp.reshape(-1, lp.shape[-1])
    flat_ids = tag_ids.reshape(-1)
    valid = (flat_ids != ignore_index).astype(jnp.float32)
    safe_ids = jnp.where(flat_ids == ignore_index, 0, flat_ids)
    tgt = jnp.take_along_axis(flat_lp, safe_ids[:, None], axis=-1)[:, 0]
    loss = -jnp.sum(tgt * valid) / jnp.maximum(jnp.sum(valid), 1.0)
    return prob, loss


if __name__ == "__main__":
    key = jax.random.PRNGKey(0)
    k_h, k_ids, k_p = jax.random.split(key, 3)

    B, S = 2, 8
    TAG_PAD_IDX = -1  # config.tag_pad_idx (CrossEntropyLoss ignore_index)

    # Synthetic BERT last_hidden_state (stands in for BertModel output).
    last_hidden = jax.random.normal(k_h, (B, S, HIDDEN), jnp.float32)

    # tag_mask: last 2 positions of each sequence are padding.
    tag_mask = jnp.concatenate(
        [jnp.ones((B, S - 2), jnp.float32), jnp.zeros((B, 2), jnp.float32)], axis=1
    )

    # tag_ids: valid classes at real tokens, pad index at padded tokens.
    tag_ids = jax.random.randint(k_ids, (B, S), 0, TAG_CLASSES, jnp.int32)
    tag_ids = jnp.where(tag_mask > 0, tag_ids, TAG_PAD_IDX)

    params = init_params(k_p)

    prob, loss = bert_based_forward(
        last_hidden, tag_mask, tag_ids, params, ignore_index=TAG_PAD_IDX
    )
    jax.block_until_ready((prob, loss))

    # Sanity check against a pure-JAX reference (same bf16 matmul operands).
    prob_ref, loss_ref = _reference(
        last_hidden, tag_mask, tag_ids, params, ignore_index=TAG_PAD_IDX
    )
    prob_f32 = prob.astype(jnp.float32)
    assert prob.shape == (B, S, TAG_CLASSES)
    assert bool(jnp.all(jnp.isfinite(prob_f32))), "non-finite prob"
    assert jnp.allclose(prob_f32, prob_ref, atol=1e-2), "prob mismatch"
    assert jnp.allclose(loss, loss_ref, rtol=1e-2, atol=1e-3), "loss mismatch"

    print("KERNEL_OK")
</pallas_src>

<mosaic_0001>
module attributes {stable_mosaic.version = 11 : i64} {
  func.func @_bert_head_kernel(%arg0: i32, %arg1: memref<16x768xf32, #tpu.memory_space<vmem>>, %arg2: memref<768x768xbf16, #tpu.memory_space<vmem>>, %arg3: memref<1x768xf32, #tpu.memory_space<vmem>>, %arg4: memref<768x128xbf16, #tpu.memory_space<vmem>>, %arg5: memref<1x128xf32, #tpu.memory_space<vmem>>, %arg6: memref<16x1xi32, #tpu.memory_space<vmem>>, %arg7: memref<16x128xbf16, #tpu.memory_space<vmem>>, %arg8: memref<16x1xf32, #tpu.memory_space<vmem>>) attributes {dimension_semantics = [#tpu.dimension_semantics<parallel>], iteration_bounds = array<i64: 1>, scalar_prefetch = 0 : i64, scratch_operands = 0 : i64, tpu.core_type = #tpu.core_type<tc>, window_params = [{transform_indices = @transform_0, window_bounds = array<i64: 16, 768>}, {pipeline_mode = #tpu.pipeline_mode<synchronous>, transform_indices = @transform_1, window_bounds = array<i64: 768, 768>}, {pipeline_mode = #tpu.pipeline_mode<synchronous>, transform_indices = @transform_2, window_bounds = array<i64: 1, 768>}, {pipeline_mode = #tpu.pipeline_mode<synchronous>, transform_indices = @transform_3, window_bounds = array<i64: 768, 128>}, {pipeline_mode = #tpu.pipeline_mode<synchronous>, transform_indices = @transform_4, window_bounds = array<i64: 1, 128>}, {transform_indices = @transform_5, window_bounds = array<i64: 16, 1>}, {transform_indices = @transform_6, window_bounds = array<i64: 16, 128>}, {transform_indices = @transform_7, window_bounds = array<i64: 16, 1>}]} {
    %c0 = arith.constant 0 : index
    %c0_0 = arith.constant 0 : index
    %0 = vector.load %arg1[%c0, %c0_0] : memref<16x768xf32, #tpu.memory_space<vmem>>, vector<16x768xf32>
    %1 = arith.truncf %0 : vector<16x768xf32> to vector<16x768xbf16>
    %c0_1 = arith.constant 0 : index
    %c0_2 = arith.constant 0 : index
    %2 = vector.load %arg2[%c0_1, %c0_2] : memref<768x768xbf16, #tpu.memory_space<vmem>>, vector<768x768xbf16>
    %cst = arith.constant dense<0.000000e+00> : vector<16x768xf32>
    %3 = tpu.matmul %1, %2, %cst {dimension_numbers = #tpu.dot_dimension_numbers<[1], [0], [0], [1], [0, 0, 1, 1], [], []>} : vector<16x768xbf16>, vector<768x768xbf16>, vector<16x768xf32> -> vector<16x768xf32>
    %c0_3 = arith.constant 0 : index
    %c0_4 = arith.constant 0 : index
    %4 = vector.load %arg3[%c0_3, %c0_4] : memref<1x768xf32, #tpu.memory_space<vmem>>, vector<1x768xf32>
    %5 = vector.broadcast %4 : vector<1x768xf32> to vector<16x768xf32>
    %6 = arith.addf %3, %5 : vector<16x768xf32>
    %cst_5 = arith.constant 0.000000e+00 : f32
    %7 = vector.broadcast %cst_5 : f32 to vector<16x768xf32>
    %8 = arith.cmpf ogt, %6, %7 : vector<16x768xf32>
    %cst_6 = arith.constant 2.000000e-01 : f32
    %9 = vector.broadcast %cst_6 : f32 to vector<16x768xf32>
    %10 = arith.mulf %9, %6 : vector<16x768xf32>
    %11 = arith.select %8, %6, %10 : vector<16x768xi1>, vector<16x768xf32>
    %12 = arith.truncf %11 : vector<16x768xf32> to vector<16x768xbf16>
    %c0_7 = arith.constant 0 : index
    %c0_8 = arith.constant 0 : index
    %13 = vector.load %arg4[%c0_7, %c0_8] : memref<768x128xbf16, #tpu.memory_space<vmem>>, vector<768x128xbf16>
    %cst_9 = arith.constant dense<0.000000e+00> : vector<16x128xf32>
    %14 = tpu.matmul %12, %13, %cst_9 {dimension_numbers = #tpu.dot_dimension_numbers<[1], [0], [0], [1], [0, 0, 1, 1], [], []>} : vector<16x768xbf16>, vector<768x128xbf16>, vector<16x128xf32> -> vector<16x128xf32>
    %c0_10 = arith.constant 0 : index
    %c0_11 = arith.constant 0 : index
    %15 = vector.load %arg5[%c0_10, %c0_11] : memref<1x128xf32, #tpu.memory_space<vmem>>, vector<1x128xf32>
    %16 = vector.broadcast %15 : vector<1x128xf32> to vector<16x128xf32>
    %17 = arith.addf %14, %16 : vector<16x128xf32>
    %c0_12 = arith.constant 0 : index
    %c0_13 = arith.constant 0 : index
    %18 = vector.load %arg6[%c0_12, %c0_13] : memref<16x1xi32, #tpu.memory_space<vmem>>, vector<16x1xi32>
    %c1_i32 = arith.constant 1 : i32
    %19 = vector.broadcast %c1_i32 : i32 to vector<16x1xi32>
    %20 = arith.andi %18, %19 : vector<16x1xi32>
    %21 = arith.sitofp %20 : vector<16x1xi32> to vector<16x1xf32>
    %c1_i32_14 = arith.constant 1 : i32
    %22 = vector.broadcast %c1_i32_14 : i32 to vector<16x1xi32>
    %23 = arith.shrsi %18, %22 : vector<16x1xi32>
    %c1_i32_15 = arith.constant 1 : i32
    %24 = vector.broadcast %c1_i32_15 : i32 to vector<16x1xi32>
    %25 = arith.andi %23, %24 : vector<16x1xi32>
    %c2_i32 = arith.constant 2 : i32
    %26 = vector.broadcast %c2_i32 : i32 to vector<16x1xi32>
    %27 = arith.shrsi %18, %26 : vector<16x1xi32>
    %cst_16 = arith.constant 1.000000e+00 : f32
    %28 = vector.broadcast %cst_16 : f32 to vector<16x1xf32>
    %29 = arith.subf %28, %21 : vector<16x1xf32>
    %cst_17 = arith.constant -1.000000e+32 : f32
    %30 = vector.broadcast %cst_17 : f32 to vector<16x1xf32>
    %31 = arith.mulf %29, %30 : vector<16x1xf32>
    %32 = vector.broadcast %31 : vector<16x1xf32> to vector<16x128xf32>
    %33 = arith.addf %17, %32 : vector<16x128xf32>
    %cst_18 = arith.constant dense<0xFF800000> : vector<16xf32>
    %34 = vector.multi_reduction <maximumf>, %33, %cst_18 [1] : vector<16x128xf32> to vector<16xf32>
    %35 = vector.shape_cast %34 : vector<16xf32> to vector<16x1xf32>
    %36 = vector.broadcast %35 : vector<16x1xf32> to vector<16x128xf32>
    %37 = arith.subf %33, %36 : vector<16x128xf32>
    %38 = math.exp %37 : vector<16x128xf32>
    %cst_19 = arith.constant dense<0.000000e+00> : vector<16xf32>
    %39 = vector.multi_reduction <add>, %38, %cst_19 [1] : vector<16x128xf32> to vector<16xf32>
    %40 = vector.shape_cast %39 : vector<16xf32> to vector<16x1xf32>
    %41 = tpu.reciprocal %40 {approx = true} : vector<16x1xf32> -> vector<16x1xf32>
    %42 = vector.broadcast %41 : vector<16x1xf32> to vector<16x128xf32>
    %43 = arith.mulf %38, %42 : vector<16x128xf32>
    %44 = arith.truncf %43 : vector<16x128xf32> to vector<16x128xbf16>
    %c0_20 = arith.constant 0 : index
    %c0_21 = arith.constant 0 : index
    %45 = vector.load %arg7[%c0_20, %c0_21] : memref<16x128xbf16, #tpu.memory_space<vmem>>, vector<16x128xbf16>
    tpu.vector_store %arg7[%c0_20, %c0_21], %44 {strides = array<i32>} : memref<16x128xbf16, #tpu.memory_space<vmem>>, vector<16x128xbf16>,
    %46 = tpu.iota {dimensions = array<i32: 1>} : vector<16x128xi32>
    %47 = vector.broadcast %27 : vector<16x1xi32> to vector<16x128xi32>
    %48 = arith.cmpi eq, %46, %47 : vector<16x128xi32>
    %49 = arith.extui %48 : vector<16x128xi1> to vector<16x128xi32>
    %50 = arith.sitofp %49 : vector<16x128xi32> to vector<16x128xf32>
    %51 = arith.mulf %33, %50 : vector<16x128xf32>
    %cst_22 = arith.constant dense<0.000000e+00> : vector<16xf32>
    %52 = vector.multi_reduction <add>, %51, %cst_22 [1] : vector<16x128xf32> to vector<16xf32>
    %53 = vector.shape_cast %52 : vector<16xf32> to vector<16x1xf32>
    %54 = arith.subf %53, %35 : vector<16x1xf32>
    %55 = math.log %40 : vector<16x1xf32>
    %56 = arith.subf %54, %55 : vector<16x1xf32>
    %cst_23 = arith.constant 0.000000e+00 : f32
    %57 = vector.broadcast %cst_23 : f32 to vector<16x1xf32>
    %58 = arith.subf %57, %56 : vector<16x1xf32>
    %c0_i32 = arith.constant 0 : i32
    %59 = vector.broadcast %c0_i32 : i32 to vector<16x1xi32>
    %60 = arith.cmpi sgt, %25, %59 : vector<16x1xi32>
    %cst_24 = arith.constant 0.000000e+00 : f32
    %61 = vector.broadcast %cst_24 : f32 to vector<16x1xf32>
    %62 = arith.select %60, %58, %61 : vector<16x1xi1>, vector<16x1xf32>
    %c0_25 = arith.constant 0 : index
    %c0_26 = arith.constant 0 : index
    %63 = vector.load %arg8[%c0_25, %c0_26] : memref<16x1xf32, #tpu.memory_space<vmem>>, vector<16x1xf32>
    tpu.vector_store %arg8[%c0_25, %c0_26], %62 {strides = array<i32>} : memref<16x1xf32, #tpu.memory_space<vmem>>, vector<16x1xf32>,
    return
  }
  func.func @transform_0(%arg0: i32) -> (i32, i32) {
    %c0_i32 = arith.constant 0 : i32
    %c0_i32_0 = arith.constant 0 : i32
    return %arg0, %c0_i32 : i32, i32
  }
  func.func @transform_1(%arg0: i32) -> (i32, i32) {
    %c0_i32 = arith.constant 0 : i32
    %c0_i32_0 = arith.constant 0 : i32
    %c0_i32_1 = arith.constant 0 : i32
    return %c0_i32, %c0_i32_0 : i32, i32
  }
  func.func @transform_2(%arg0: i32) -> (i32, i32) {
    %c0_i32 = arith.constant 0 : i32
    %c0_i32_0 = arith.constant 0 : i32
    %c0_i32_1 = arith.constant 0 : i32
    return %c0_i32, %c0_i32_0 : i32, i32
  }
  func.func @transform_3(%arg0: i32) -> (i32, i32) {
    %c0_i32 = arith.constant 0 : i32
    %c0_i32_0 = arith.constant 0 : i32
    %c0_i32_1 = arith.constant 0 : i32
    return %c0_i32, %c0_i32_0 : i32, i32
  }
  func.func @transform_4(%arg0: i32) -> (i32, i32) {
    %c0_i32 = arith.constant 0 : i32
    %c0_i32_0 = arith.constant 0 : i32
    %c0_i32_1 = arith.constant 0 : i32
    return %c0_i32, %c0_i32_0 : i32, i32
  }
  func.func @transform_5(%arg0: i32) -> (i32, i32) {
    %c0_i32 = arith.constant 0 : i32
    %c0_i32_0 = arith.constant 0 : i32
    return %arg0, %c0_i32 : i32, i32
  }
  func.func @transform_6(%arg0: i32) -> (i32, i32) {
    %c0_i32 = arith.constant 0 : i32
    %c0_i32_0 = arith.constant 0 : i32
    return %arg0, %c0_i32 : i32, i32
  }
  func.func @transform_7(%arg0: i32) -> (i32, i32) {
    %c0_i32 = arith.constant 0 : i32
    %c0_i32_0 = arith.constant 0 : i32
    return %arg0, %c0_i32 : i32, i32
  }
}

</mosaic_0001>

<llo_original>
// kernel: bert_based_forward.1
$region0: #{bert_based_forward.1}
  #allocation0 [shape = 'u32[]', space=smem, size = 0x4, offset = 0x4, fixed_abs, tag = 'smem constant byte address 0x4 - core index']
  #allocation1 [shape = 'u32[144,128]{1,0:T(1,128)}', space=vmem, size = 0x12000, scoped, tag = 'internal scratch']
  %s0 = inlined_call_operand.hbm [shape: f32[16,768], index: 0, kind: input, shape index: {}]
  %s1 = inlined_call_operand.hbm [shape: bf16[768,768], index: 1, kind: input, shape index: {}]
  %s2 = inlined_call_operand.hbm [shape: f32[1,768], index: 2, kind: input, shape index: {}]
  %s3 = inlined_call_operand.hbm [shape: bf16[768,128], index: 3, kind: input, shape index: {}]
  %s4 = inlined_call_operand.hbm [shape: f32[1,128], index: 4, kind: input, shape index: {}]
  %s5 = inlined_call_operand.hbm [shape: s32[16,1], index: 5, kind: input, shape index: {}]
  %s6 = inlined_call_operand.hbm [shape: bf16[16,128], index: 6, kind: output, shape index: {0}]
  %s7 = inlined_call_operand.hbm [shape: f32[16,1], index: 7, kind: output, shape index: {1}]
  %8 = xla_tuple %s6, %s7
  %s9 = sld [smem:[#allocation0]]
  $region66: #{bert_based_forward.1} parent=0
    _
  %s11 = ssub.s32 1, %s9
  %s12 = scalar_select 0, %s11, %s9
  $region1: #{bert_based_forward.1} parent=0
    #allocation2 [shape = 'u8[49152]{0}', space=vmem, size = 0xc000, scoped, tag = 'input window, operand 0, single buffered']
    #allocation3 [shape = 's32[1]{0}', space=sflag, size = 0x4, scoped, tag = 'scoped memory for bert_based_forward.1']
    #allocation4 [shape = 's32[1]{0}', space=sflag, size = 0x4, scoped, tag = 'scoped memory for bert_based_forward.1']
    #allocation5 [shape = 'u8[1179648]{0}', space=vmem, size = 0x120000, scoped, tag = 'input window, operand 1, single buffered']
    #allocation6 [shape = 's32[1]{0}', space=sflag, size = 0x4, scoped, tag = 'scoped memory for bert_based_forward.1']
    #allocation7 [shape = 'u8[3072]{0}', space=vmem, size = 0xc00, scoped, tag = 'input window, operand 2, single buffered']
    #allocation8 [shape = 'u8[196608]{0}', space=vmem, size = 0x30000, scoped, tag = 'input window, operand 3, single buffered']
    #allocation9 [shape = 's32[1]{0}', space=sflag, size = 0x4, scoped, tag = 'scoped memory for bert_based_forward.1']
    #allocation10 [shape = 'u8[512]{0}', space=vmem, size = 0x400, scoped, tag = 'input window, operand 4, single buffered']
    #allocation11 [shape = 'u8[8192]{0}', space=vmem, size = 0x2000, scoped, tag = 'input window, operand 5, single buffered']
    #allocation12 [shape = 's32[1]{0}', space=sflag, size = 0x4, scoped, tag = 'scoped memory for bert_based_forward.1']
    #allocation13 [shape = 'u8[4096]{0}', space=vmem, size = 0x1000, scoped, tag = 'output window, operand 0, single buffered']
    #allocation14 [shape = 'u8[8192]{0}', space=vmem, size = 0x2000, scoped, tag = 'output window, operand 1, single buffered']
    #allocation15 [shape = 's32[1]{0}', space=sflag, size = 0x4, scoped, tag = 'scoped memory for bert_based_forward.1']
    %13 = vsyncpa [#allocation3], 0
    %14 = vsyncpa [#allocation6], 0
    %15 = vsyncpa [#allocation9], 0
    %16 = vsyncpa [#allocation12], 0
    %17 = vsyncpa [#allocation4], 0
    %18 = vsyncpa [#allocation15], 0
    // Predicated region
    $region2: #{bert_based_forward.1} parent=1 // pred_check
      _
    $region3: #{bert_based_forward.1} parent=1 // pred_check_branch
      %20 = sbr.rel (0) target = $region5
    $region4: #{bert_based_forward.1} parent=1 // pred_region
      %s22 = ssub.s32 1536, 1536
      %23 = vsyncadd [#allocation3], %s22
      %s24 = sshll.u32 [#allocation2], 4
      %s25 = int_to_ptr.vmem [resolvable:$true] %s24
      %30 = dma.hbm_to_vmem [thread:$0]  %s0, 1536, %s25, [#allocation3], 768, 768, 48
    $region5: #{bert_based_forward.1} parent=1 // pred_fallthru
      _
    // Predicated region
    $region6: #{bert_based_forward.1} parent=1 // pred_check
      _
    $region7: #{bert_based_forward.1} parent=1 // pred_check_branch
      %32 = sbr.rel (0) target = $region9
    $region8: #{bert_based_forward.1} parent=1 // pred_region
      %s34 = ssub.s32 36864, 36864
      %35 = vsyncadd [#allocation6], %s34
      %s36 = sshll.u32 [#allocation5], 4
      %s37 = int_to_ptr.vmem [resolvable:$true] %s36
      %42 = dma.hbm_to_vmem [thread:$0]  %s1, 36864, %s37, [#allocation6], 384, 384, 24
    $region9: #{bert_based_forward.1} parent=1 // pred_fallthru
      _
    // Predicated region
    $region10: #{bert_based_forward.1} parent=1 // pred_check
      _
    $region11: #{bert_based_forward.1} parent=1 // pred_check_branch
      %44 = sbr.rel (0) target = $region13
    $region12: #{bert_based_forward.1} parent=1 // pred_region
      %s46 = ssub.s32 96, 96
      %47 = vsyncadd [#allocation6], %s46
      %s49 = sshll.u32 [#allocation7], 4
      %s50 = int_to_ptr.vmem [resolvable:$true] %s49
      %52 = dma.hbm_to_vmem [thread:$0]  %s2, 96, %s50, [#allocation6]
    $region13: #{bert_based_forward.1} parent=1 // pred_fallthru
      _
    // Predicated region
    $region14: #{bert_based_forward.1} parent=1 // pred_check
      _
    $region15: #{bert_based_forward.1} parent=1 // pred_check_branch
      %54 = sbr.rel (0) target = $region17
    $region16: #{bert_based_forward.1} parent=1 // pred_region
      %s56 = ssub.s32 6144, 6144
      %57 = vsyncadd [#allocation9], %s56
      %s58 = sshll.u32 [#allocation8], 4
      %s59 = int_to_ptr.vmem [resolvable:$true] %s58
      %64 = dma.hbm_to_vmem [thread:$0]  %s3, 6144, %s59, [#allocation9], 64, 64, 4
    $region17: #{bert_based_forward.1} parent=1 // pred_fallthru
      _
    // Predicated region
    $region18: #{bert_based_forward.1} parent=1 // pred_check
      _
    $region19: #{bert_based_forward.1} parent=1 // pred_check_branch
      %66 = sbr.rel (0) target = $region21
    $region20: #{bert_based_forward.1} parent=1 // pred_region
      %s68 = ssub.s32 16, 16
      %69 = vsyncadd [#allocation9], %s68
      %s71 = sshll.u32 [#allocation10], 4
      %s72 = int_to_ptr.vmem [resolvable:$true] %s71
      %74 = dma.hbm_to_vmem [thread:$0]  %s4, 16, %s72, [#allocation9]
    $region21: #{bert_based_forward.1} parent=1 // pred_fallthru
      _
    // Predicated region
    $region22: #{bert_based_forward.1} parent=1 // pred_check
      _
    $region23: #{bert_based_forward.1} parent=1 // pred_check_branch
      %76 = sbr.rel (0) target = $region25
    $region24: #{bert_based_forward.1} parent=1 // pred_region
      %s78 = ssub.s32 256, 256
      %79 = vsyncadd [#allocation12], %s78
      %s80 = sshll.u32 [#allocation11], 4
      %s81 = int_to_ptr.vmem [resolvable:$true] %s80
      %86 = dma.hbm_to_vmem [thread:$0]  %s5, 256, %s81, [#allocation12], 128, 128, 8
    $region25: #{bert_based_forward.1} parent=1 // pred_fallthru
      _
    // Predicated region
    $region26: #{bert_based_forward.1} parent=1 // pred_check
      _
    $region27: #{bert_based_forward.1} parent=1 // pred_check_branch
      %88 = sbr.rel (0) target = $region29
    $region28: #{bert_based_forward.1} parent=1 // pred_region
      %89 = dma.done [#allocation3], 1536
    $region29: #{bert_based_forward.1} parent=1 // pred_fallthru
      _
    // Predicated region
    $region30: #{bert_based_forward.1} parent=1 // pred_check
      _
    $region31: #{bert_based_forward.1} parent=1 // pred_check_branch
      %91 = sbr.rel (0) target = $region33
    $region32: #{bert_based_forward.1} parent=1 // pred_region
      %92 = dma.done [#allocation6], 36864
    $region33: #{bert_based_forward.1} parent=1 // pred_fallthru
      _
    // Predicated region
    $region34: #{bert_based_forward.1} parent=1 // pred_check
      _
    $region35: #{bert_based_forward.1} parent=1 // pred_check_branch
      %94 = sbr.rel (0) target = $region37
    $region36: #{bert_based_forward.1} parent=1 // pred_region
      %95 = dma.done [#allocation6], 96
    $region37: #{bert_based_forward.1} parent=1 // pred_fallthru
      _
    // Predicated region
    $region38: #{bert_based_forward.1} parent=1 // pred_check
      _
    $region39: #{bert_based_forward.1} parent=1 // pred_check_branch
      %97 = sbr.rel (0) target = $region41
    $region40: #{bert_based_forward.1} parent=1 // pred_region
      %98 = dma.done [#allocation9], 6144
    $region41: #{bert_based_forward.1} parent=1 // pred_fallthru
      _
    // Predicated region
    $region42: #{bert_based_forward.1} parent=1 // pred_check
      _
    $region43: #{bert_based_forward.1} parent=1 // pred_check_branch
      %100 = sbr.rel (0) target = $region45
    $region44: #{bert_based_forward.1} parent=1 // pred_region
      %101 = dma.done [#allocation9], 16
    $region45: #{bert_based_forward.1} parent=1 // pred_fallthru
      _
    // Predicated region
    $region46: #{bert_based_forward.1} parent=1 // pred_check
      _
    $region47: #{bert_based_forward.1} parent=1 // pred_check_branch
      %103 = sbr.rel (0) target = $region49
    $region48: #{bert_based_forward.1} parent=1 // pred_region
      %104 = dma.done [#allocation12], 256
    $region49: #{bert_based_forward.1} parent=1 // pred_fallthru
      _
    %v106 = vld [vmem:[#allocation2] sm:$0xff]
    %v107 = vld [vmem:[#allocation2 + $0x8] sm:$0xff]
    %v108 = vld [vmem:[#allocation2 + $0x10] sm:$0xff]
    %v109 = vld [vmem:[#allocation2 + $0x18] sm:$0xff]
    %v110 = vld [vmem:[#allocation2 + $0x20] sm:$0xff]
    %v111 = vld [vmem:[#allocation2 + $0x28] sm:$0xff]
    %v112 = vld [vmem:[#allocation2 + $0x30] sm:$0xff]
    %v113 = vld [vmem:[#allocation2 + $0x38] sm:$0xff]
    %v114 = vld [vmem:[#allocation2 + $0x40] sm:$0xff]
    %v115 = vld [vmem:[#allocation2 + $0x48] sm:$0xff]
    %v116 = vld [vmem:[#allocation2 + $0x50] sm:$0xff]
    %v117 = vld [vmem:[#allocation2 + $0x58] sm:$0xff]
    %v118 = vpack.c.bf16 %v112, %v106
    %v119 = vpack.c.bf16 %v113, %v107
    %v120 = vpack.c.bf16 %v114, %v108
    %v121 = vpack.c.bf16 %v115, %v109
    %v122 = vpack.c.bf16 %v116, %v110
    %v123 = vpack.c.bf16 %v117, %v111
    %v124 = vld [vmem:[#allocation5] sm:$0xff]
    %v125 = vld [vmem:[#allocation5 + $0x8] sm:$0xff]
    %v126 = vld [vmem:[#allocation5 + $0x10] sm:$0xff]
    %v127 = vld [vmem:[#allocation5 + $0x18] sm:$0xff]
    %v128 = vld [vmem:[#allocation5 + $0x20] sm:$0xff]
    %v129 = vld [vmem:[#allocation5 + $0x28] sm:$0xff]
    %v130 = vld [vmem:[#allocation5 + $0x30] sm:$0xff]
    %v131 = vld [vmem:[#allocation5 + $0x38] sm:$0xff]
    %v132 = vld [vmem:[#allocation5 + $0x40] sm:$0xff]
    %v133 = vld [vmem:[#allocation5 + $0x48] sm:$0xff]
    %v134 = vld [vmem:[#allocation5 + $0x50] sm:$0xff]
    %v135 = vld [vmem:[#allocation5 + $0x58] sm:$0xff]
    %v136 = vld [vmem:[#allocation5 + $0x60] sm:$0xff]
    %v137 = vld [vmem:[#allocation5 + $0x68] sm:$0xff]
    %v138 = vld [vmem:[#allocation5 + $0x70] sm:$0xff]
    %v139 = vld [vmem:[#allocation5 + $0x78] sm:$0xff]
    %v140 = vld [vmem:[#allocation5 + $0x80] sm:$0xff]
    %v141 = vld [vmem:[#allocation5 + $0x88] sm:$0xff]
    %v142 = vld [vmem:[#allocation5 + $0x90] sm:$0xff]
    %v143 = vld [vmem:[#allocation5 + $0x98] sm:$0xff]
    %v144 = vld [vmem:[#allocation5 + $0xa0] sm:$0xff]
    %v145 = vld [vmem:[#allocation5 + $0xa8] sm:$0xff]
    %v146 = vld [vmem:[#allocation5 + $0xb0] sm:$0xff]
    %v147 = vld [vmem:[#allocation5 + $0xb8] sm:$0xff]
    %v148 = vld [vmem:[#allocation5 + $0xc0] sm:$0xff]
    %v149 = vld [vmem:[#allocation5 + $0xc8] sm:$0xff]
    %v150 = vld [vmem:[#allocation5 + $0xd0] sm:$0xff]
    %v151 = vld [vmem:[#allocation5 + $0xd8] sm:$0xff]
    %v152 = vld [vmem:[#allocation5 + $0xe0] sm:$0xff]
    %v153 = vld [vmem:[#allocation5 + $0xe8] sm:$0xff]
    %v154 = vld [vmem:[#allocation5 + $0xf0] sm:$0xff]
    %v155 = vld [vmem:[#allocation5 + $0xf8] sm:$0xff]
    %v156 = vld [vmem:[#allocation5 + $0x100] sm:$0xff]
    %v157 = vld [vmem:[#allocation5 + $0x108] sm:$0xff]
    %v158 = vld [vmem:[#allocation5 + $0x110] sm:$0xff]
    %v159 = vld [vmem:[#allocation5 + $0x118] sm:$0xff]
    %v160 = vld [vmem:[#allocation5 + $0x120] sm:$0xff]
    %v161 = vld [vmem:[#allocation5 + $0x128] sm:$0xff]
    %v162 = vld [vmem:[#allocation5 + $0x130] sm:$0xff]
    %v163 = vld [vmem:[#allocation5 + $0x138] sm:$0xff]
    %v164 = vld [vmem:[#allocation5 + $0x140] sm:$0xff]
    %v165 = vld [vmem:[#allocation5 + $0x148] sm:$0xff]
    %v166 = vld [vmem:[#allocation5 + $0x150] sm:$0xff]
    %v167 = vld [vmem:[#allocation5 + $0x158] sm:$0xff]
    %v168 = vld [vmem:[#allocation5 + $0x160] sm:$0xff]
    %v169 = vld [vmem:[#allocation5 + $0x168] sm:$0xff]
    %v170 = vld [vmem:[#allocation5 + $0x170] sm:$0xff]
    %v171 = vld [vmem:[#allocation5 + $0x178] sm:$0xff]
    %v172 = vld [vmem:[#allocation5 + $0x180] sm:$0xff]
    %v173 = vld [vmem:[#allocation5 + $0x188] sm:$0xff]
    %v174 = vld [vmem:[#allocation5 + $0x190] sm:$0xff]
    %v175 = vld [vmem:[#allocation5 + $0x198] sm:$0xff]
    %v176 = vld [vmem:[#allocation5 + $0x1a0] sm:$0xff]
    %v177 = vld [vmem:[#allocation5 + $0x1a8] sm:$0xff]
    %v178 = vld [vmem:[#allocation5 + $0x1b0] sm:$0xff]
    %v179 = vld [vmem:[#allocation5 + $0x1b8] sm:$0xff]
    %v180 = vld [vmem:[#allocation5 + $0x1c0] sm:$0xff]
    %v181 = vld [vmem:[#allocation5 + $0x1c8] sm:$0xff]
    %v182 = vld [vmem:[#allocation5 + $0x1d0] sm:$0xff]
    %v183 = vld [vmem:[#allocation5 + $0x1d8] sm:$0xff]
    %v184 = vld [vmem:[#allocation5 + $0x1e0] sm:$0xff]
    %v185 = vld [vmem:[#allocation5 + $0x1e8] sm:$0xff]
    %v186 = vld [vmem:[#allocation5 + $0x1f0] sm:$0xff]
    %v187 = vld [vmem:[#allocation5 + $0x1f8] sm:$0xff]
    %v188 = vld [vmem:[#allocation5 + $0x200] sm:$0xff]
    %v189 = vld [vmem:[#allocation5 + $0x208] sm:$0xff]
    %v190 = vld [vmem:[#allocation5 + $0x210] sm:$0xff]
    %v191 = vld [vmem:[#allocation5 + $0x218] sm:$0xff]
    %v192 = vld [vmem:[#allocation5 + $0x220] sm:$0xff]
    %v193 = vld [vmem:[#allocation5 + $0x228] sm:$0xff]
    %v194 = vld [vmem:[#allocation5 + $0x230] sm:$0xff]
    %v195 = vld [vmem:[#allocation5 + $0x238] sm:$0xff]
    %v196 = vld [vmem:[#allocation5 + $0x240] sm:$0xff]
    %v197 = vld [vmem:[#allocation5 + $0x248] sm:$0xff]
    %v198 = vld [vmem:[#allocation5 + $0x250] sm:$0xff]
    %v199 = vld [vmem:[#allocation5 + $0x258] sm:$0xff]
    %v200 = vld [vmem:[#allocation5 + $0x260] sm:$0xff]
    %v201 = vld [vmem:[#allocation5 + $0x268] sm:$0xff]
    %v202 = vld [vmem:[#allocation5 + $0x270] sm:$0xff]
    %v203 = vld [vmem:[#allocation5 + $0x278] sm:$0xff]
    %v204 = vld [vmem:[#allocation5 + $0x280] sm:$0xff]
    %v205 = vld [vmem:[#allocation5 + $0x288] sm:$0xff]
    %v206 = vld [vmem:[#allocation5 + $0x290] sm:$0xff]
    %v207 = vld [vmem:[#allocation5 + $0x298] sm:$0xff]
    %v208 = vld [vmem:[#allocation5 + $0x2a0] sm:$0xff]
    %v209 = vld [vmem:[#allocation5 + $0x2a8] sm:$0xff]
    %v210 = vld [vmem:[#allocation5 + $0x2b0] sm:$0xff]
    %v211 = vld [vmem:[#allocation5 + $0x2b8] sm:$0xff]
    %v212 = vld [vmem:[#allocation5 + $0x2c0] sm:$0xff]
    %v213 = vld [vmem:[#allocation5 + $0x2c8] sm:$0xff]
    %v214 = vld [vmem:[#allocation5 + $0x2d0] sm:$0xff]
    %v215 = vld [vmem:[#allocation5 + $0x2d8] sm:$0xff]
    %v216 = vld [vmem:[#allocation5 + $0x2e0] sm:$0xff]
    %v217 = vld [vmem:[#allocation5 + $0x2e8] sm:$0xff]
    %v218 = vld [vmem:[#allocation5 + $0x2f0] sm:$0xff]
    %v219 = vld [vmem:[#allocation5 + $0x2f8] sm:$0xff]
    %v220 = vld [vmem:[#allocation5 + $0x300] sm:$0xff]
    %v221 = vld [vmem:[#allocation5 + $0x308] sm:$0xff]
    %v222 = vld [vmem:[#allocation5 + $0x310] sm:$0xff]
    %v223 = vld [vmem:[#allocation5 + $0x318] sm:$0xff]
    %v224 = vld [vmem:[#allocation5 + $0x320] sm:$0xff]
    %v225 = vld [vmem:[#allocation5 + $0x328] sm:$0xff]
    %v226 = vld [vmem:[#allocation5 + $0x330] sm:$0xff]
    %v227 = vld [vmem:[#allocation5 + $0x338] sm:$0xff]
    %v228 = vld [vmem:[#allocation5 + $0x340] sm:$0xff]
    %v229 = vld [vmem:[#allocation5 + $0x348] sm:$0xff]
    %v230 = vld [vmem:[#allocation5 + $0x350] sm:$0xff]
    %v231 = vld [vmem:[#allocation5 + $0x358] sm:$0xff]
    %v232 = vld [vmem:[#allocation5 + $0x360] sm:$0xff]
    %v233 = vld [vmem:[#allocation5 + $0x368] sm:$0xff]
    %v234 = vld [vmem:[#allocation5 + $0x370] sm:$0xff]
    %v235 = vld [vmem:[#allocation5 + $0x378] sm:$0xff]
    %v236 = vld [vmem:[#allocation5 + $0x380] sm:$0xff]
    %v237 = vld [vmem:[#allocation5 + $0x388] sm:$0xff]
    %v238 = vld [vmem:[#allocation5 + $0x390] sm:$0xff]
    %v239 = vld [vmem:[#allocation5 + $0x398] sm:$0xff]
    %v240 = vld [vmem:[#allocation5 + $0x3a0] sm:$0xff]
    %v241 = vld [vmem:[#allocation5 + $0x3a8] sm:$0xff]
    %v242 = vld [vmem:[#allocation5 + $0x3b0] sm:$0xff]
    %v243 = vld [vmem:[#allocation5 + $0x3b8] sm:$0xff]
    %v244 = vld [vmem:[#allocation5 + $0x3c0] sm:$0xff]
    %v245 = vld [vmem:[#allocation5 + $0x3c8] sm:$0xff]
    %v246 = vld [vmem:[#allocation5 + $0x3d0] sm:$0xff]
    %v247 = vld [vmem:[#allocation5 + $0x3d8] sm:$0xff]
    %v248 = vld [vmem:[#allocation5 + $0x3e0] sm:$0xff]
    %v249 = vld [vmem:[#allocation5 + $0x3e8] sm:$0xff]
    %v250 = vld [vmem:[#allocation5 + $0x3f0] sm:$0xff]
    %v251 = vld [vmem:[#allocation5 + $0x3f8] sm:$0xff]
    %v252 = vld [vmem:[#allocation5 + $0x400] sm:$0xff]
    %v253 = vld [vmem:[#allocation5 + $0x408] sm:$0xff]
    %v254 = vld [vmem:[#allocation5 + $0x410] sm:$0xff]
    %v255 = vld [vmem:[#allocation5 + $0x418] sm:$0xff]
    %v256 = vld [vmem:[#allocation5 + $0x420] sm:$0xff]
    %v257 = vld [vmem:[#allocation5 + $0x428] sm:$0xff]
    %v258 = vld [vmem:[#allocation5 + $0x430] sm:$0xff]
    %v259 = vld [vmem:[#allocation5 + $0x438] sm:$0xff]
    %v260 = vld [vmem:[#allocation5 + $0x440] sm:$0xff]
    %v261 = vld [vmem:[#allocation5 + $0x448] sm:$0xff]
    %v262 = vld [vmem:[#allocation5 + $0x450] sm:$0xff]
    %v263 = vld [vmem:[#allocation5 + $0x458] sm:$0xff]
    %v264 = vld [vmem:[#allocation5 + $0x460] sm:$0xff]
    %v265 = vld [vmem:[#allocation5 + $0x468] sm:$0xff]
    %v266 = vld [vmem:[#allocation5 + $0x470] sm:$0xff]
    %v267 = vld [vmem:[#allocation5 + $0x478] sm:$0xff]
    %v268 = vld [vmem:[#allocation5 + $0x480] sm:$0xff]
    %v269 = vld [vmem:[#allocation5 + $0x488] sm:$0xff]
    %v270 = vld [vmem:[#allocation5 + $0x490] sm:$0xff]
    %v271 = vld [vmem:[#allocation5 + $0x498] sm:$0xff]
    %v272 = vld [vmem:[#allocation5 + $0x4a0] sm:$0xff]
    %v273 = vld [vmem:[#allocation5 + $0x4a8] sm:$0xff]
    %v274 = vld [vmem:[#allocation5 + $0x4b0] sm:$0xff]
    %v275 = vld [vmem:[#allocation5 + $0x4b8] sm:$0xff]
    %v276 = vld [vmem:[#allocation5 + $0x4c0] sm:$0xff]
    %v277 = vld [vmem:[#allocation5 + $0x4c8] sm:$0xff]
    %v278 = vld [vmem:[#allocation5 + $0x4d0] sm:$0xff]
    %v279 = vld [vmem:[#allocation5 + $0x4d8] sm:$0xff]
    %v280 = vld [vmem:[#allocation5 + $0x4e0] sm:$0xff]
    %v281 = vld [vmem:[#allocation5 + $0x4e8] sm:$0xff]
    %v282 = vld [vmem:[#allocation5 + $0x4f0] sm:$0xff]
    %v283 = vld [vmem:[#allocation5 + $0x4f8] sm:$0xff]
    %v284 = vld [vmem:[#allocation5 + $0x500] sm:$0xff]
    %v285 = vld [vmem:[#allocation5 + $0x508] sm:$0xff]
    %v286 = vld [vmem:[#allocation5 + $0x510] sm:$0xff]
    %v287 = vld [vmem:[#allocation5 + $0x518] sm:$0xff]
    %v288 = vld [vmem:[#allocation5 + $0x520] sm:$0xff]
    %v289 = vld [vmem:[#allocation5 + $0x528] sm:$0xff]
    %v290 = vld [vmem:[#allocation5 + $0x530] sm:$0xff]
    %v291 = vld [vmem:[#allocation5 + $0x538] sm:$0xff]
    %v292 = vld [vmem:[#allocation5 + $0x540] sm:$0xff]
    %v293 = vld [vmem:[#allocation5 + $0x548] sm:$0xff]
    %v294 = vld [vmem:[#allocation5 + $0x550] sm:$0xff]
    %v295 = vld [vmem:[#allocation5 + $0x558] sm:$0xff]
    %v296 = vld [vmem:[#allocation5 + $0x560] sm:$0xff]
    %v297 = vld [vmem:[#allocation5 + $0x568] sm:$0xff]
    %v298 = vld [vmem:[#allocation5 + $0x570] sm:$0xff]
    %v299 = vld [vmem:[#allocation5 + $0x578] sm:$0xff]
    %v300 = vld [vmem:[#allocation5 + $0x580] sm:$0xff]
    %v301 = vld [vmem:[#allocation5 + $0x588] sm:$0xff]
    %v302 = vld [vmem:[#allocation5 + $0x590] sm:$0xff]
    %v303 = vld [vmem:[#allocation5 + $0x598] sm:$0xff]
    %v304 = vld [vmem:[#allocation5 + $0x5a0] sm:$0xff]
    %v305 = vld [vmem:[#allocation5 + $0x5a8] sm:$0xff]
    %v306 = vld [vmem:[#allocation5 + $0x5b0] sm:$0xff]
    %v307 = vld [vmem:[#allocation5 + $0x5b8] sm:$0xff]
    %v308 = vld [vmem:[#allocation5 + $0x5c0] sm:$0xff]
    %v309 = vld [vmem:[#allocation5 + $0x5c8] sm:$0xff]
    %v310 = vld [vmem:[#allocation5 + $0x5d0] sm:$0xff]
    %v311 = vld [vmem:[#allocation5 + $0x5d8] sm:$0xff]
    %v312 = vld [vmem:[#allocation5 + $0x5e0] sm:$0xff]
    %v313 = vld [vmem:[#allocation5 + $0x5e8] sm:$0xff]
    %v314 = vld [vmem:[#allocation5 + $0x5f0] sm:$0xff]
    %v315 = vld [vmem:[#allocation5 + $0x5f8] sm:$0xff]
    %v316 = vld [vmem:[#allocation5 + $0x600] sm:$0xff]
    %v317 = vld [vmem:[#allocation5 + $0x608] sm:$0xff]
    %v318 = vld [vmem:[#allocation5 + $0x610] sm:$0xff]
    %v319 = vld [vmem:[#allocation5 + $0x618] sm:$0xff]
    %v320 = vld [vmem:[#allocation5 + $0x620] sm:$0xff]
    %v321 = vld [vmem:[#allocation5 + $0x628] sm:$0xff]
    %v322 = vld [vmem:[#allocation5 + $0x630] sm:$0xff]
    %v323 = vld [vmem:[#allocation5 + $0x638] sm:$0xff]
    %v324 = vld [vmem:[#allocation5 + $0x640] sm:$0xff]
    %v325 = vld [vmem:[#allocation5 + $0x648] sm:$0xff]
    %v326 = vld [vmem:[#allocation5 + $0x650] sm:$0xff]
    %v327 = vld [vmem:[#allocation5 + $0x658] sm:$0xff]
    %v328 = vld [vmem:[#allocation5 + $0x660] sm:$0xff]
    %v329 = vld [vmem:[#allocation5 + $0x668] sm:$0xff]
    %v330 = vld [vmem:[#allocation5 + $0x670] sm:$0xff]
    %v331 = vld [vmem:[#allocation5 + $0x678] sm:$0xff]
    %v332 = vld [vmem:[#allocation5 + $0x680] sm:$0xff]
    %v333 = vld [vmem:[#allocation5 + $0x688] sm:$0xff]
    %v334 = vld [vmem:[#allocation5 + $0x690] sm:$0xff]
    %v335 = vld [vmem:[#allocation5 + $0x698] sm:$0xff]
    %v336 = vld [vmem:[#allocation5 + $0x6a0] sm:$0xff]
    %v337 = vld [vmem:[#allocation5 + $0x6a8] sm:$0xff]
    %v338 = vld [vmem:[#allocation5 + $0x6b0] sm:$0xff]
    %v339 = vld [vmem:[#allocation5 + $0x6b8] sm:$0xff]
    %v340 = vld [vmem:[#allocation5 + $0x6c0] sm:$0xff]
    %v341 = vld [vmem:[#allocation5 + $0x6c8] sm:$0xff]
    %v342 = vld [vmem:[#allocation5 + $0x6d0] sm:$0xff]
    %v343 = vld [vmem:[#allocation5 + $0x6d8] sm:$0xff]
    %v344 = vld [vmem:[#allocation5 + $0x6e0] sm:$0xff]
    %v345 = vld [vmem:[#allocation5 + $0x6e8] sm:$0xff]
    %v346 = vld [vmem:[#allocation5 + $0x6f0] sm:$0xff]
    %v347 = vld [vmem:[#allocation5 + $0x6f8] sm:$0xff]
    %v348 = vld [vmem:[#allocation5 + $0x700] sm:$0xff]
    %v349 = vld [vmem:[#allocation5 + $0x708] sm:$0xff]
    %v350 = vld [vmem:[#allocation5 + $0x710] sm:$0xff]
    %v351 = vld [vmem:[#allocation5 + $0x718] sm:$0xff]
    %v352 = vld [vmem:[#allocation5 + $0x720] sm:$0xff]
    %v353 = vld [vmem:[#allocation5 + $0x728] sm:$0xff]
    %v354 = vld [vmem:[#allocation5 + $0x730] sm:$0xff]
    %v355 = vld [vmem:[#allocation5 + $0x738] sm:$0xff]
    %v356 = vld [vmem:[#allocation5 + $0x740] sm:$0xff]
    %v357 = vld [vmem:[#allocation5 + $0x748] sm:$0xff]
    %v358 = vld [vmem:[#allocation5 + $0x750] sm:$0xff]
    %v359 = vld [vmem:[#allocation5 + $0x758] sm:$0xff]
    %v360 = vld [vmem:[#allocation5 + $0x760] sm:$0xff]
    %v361 = vld [vmem:[#allocation5 + $0x768] sm:$0xff]
    %v362 = vld [vmem:[#allocation5 + $0x770] sm:$0xff]
    %v363 = vld [vmem:[#allocation5 + $0x778] sm:$0xff]
    %v364 = vld [vmem:[#allocation5 + $0x780] sm:$0xff]
    %v365 = vld [vmem:[#allocation5 + $0x788] sm:$0xff]
    %v366 = vld [vmem:[#allocation5 + $0x790] sm:$0xff]
    %v367 = vld [vmem:[#allocation5 + $0x798] sm:$0xff]
    %v368 = vld [vmem:[#allocation5 + $0x7a0] sm:$0xff]
    %v369 = vld [vmem:[#allocation5 + $0x7a8] sm:$0xff]
    %v370 = vld [vmem:[#allocation5 + $0x7b0] sm:$0xff]
    %v371 = vld [vmem:[#allocation5 + $0x7b8] sm:$0xff]
    %v372 = vld [vmem:[#allocation5 + $0x7c0] sm:$0xff]
    %v373 = vld [vmem:[#allocation5 + $0x7c8] sm:$0xff]
    %v374 = vld [vmem:[#allocation5 + $0x7d0] sm:$0xff]
    %v375 = vld [vmem:[#allocation5 + $0x7d8] sm:$0xff]
    %v376 = vld [vmem:[#allocation5 + $0x7e0] sm:$0xff]
    %v377 = vld [vmem:[#allocation5 + $0x7e8] sm:$0xff]
    %v378 = vld [vmem:[#allocation5 + $0x7f0] sm:$0xff]
    %v379 = vld [vmem:[#allocation5 + $0x7f8] sm:$0xff]
    %v380 = vld [vmem:[#allocation5 + $0x800] sm:$0xff]
    %v381 = vld [vmem:[#allocation5 + $0x808] sm:$0xff]
    %v382 = vld [vmem:[#allocation5 + $0x810] sm:$0xff]
    %v383 = vld [vmem:[#allocation5 + $0x818] sm:$0xff]
    %v384 = vld [vmem:[#allocation5 + $0x820] sm:$0xff]
    %v385 = vld [vmem:[#allocation5 + $0x828] sm:$0xff]
    %v386 = vld [vmem:[#allocation5 + $0x830] sm:$0xff]
    %v387 = vld [vmem:[#allocation5 + $0x838] sm:$0xff]
    %v388 = vld [vmem:[#allocation5 + $0x840] sm:$0xff]
    %v389 = vld [vmem:[#allocation5 + $0x848] sm:$0xff]
    %v390 = vld [vmem:[#allocation5 + $0x850] sm:$0xff]
    %v391 = vld [vmem:[#allocation5 + $0x858] sm:$0xff]
    %v392 = vld [vmem:[#allocation5 + $0x860] sm:$0xff]
    %v393 = vld [vmem:[#allocation5 + $0x868] sm:$0xff]
    %v394 = vld [vmem:[#allocation5 + $0x870] sm:$0xff]
    %v395 = vld [vmem:[#allocation5 + $0x878] sm:$0xff]
    %v396 = vld [vmem:[#allocation5 + $0x880] sm:$0xff]
    %v397 = vld [vmem:[#allocation5 + $0x888] sm:$0xff]
    %v398 = vld [vmem:[#allocation5 + $0x890] sm:$0xff]
    %v399 = vld [vmem:[#allocation5 + $0x898] sm:$0xff]
    %v400 = vld [vmem:[#allocation5 + $0x8a0] sm:$0xff]
    %v401 = vld [vmem:[#allocation5 + $0x8a8] sm:$0xff]
    %v402 = vld [vmem:[#allocation5 + $0x8b0] sm:$0xff]
    %v403 = vld [vmem:[#allocation5 + $0x8b8] sm:$0xff]
    %v404 = vld [vmem:[#allocation5 + $0x8c0] sm:$0xff]
    %v405 = vld [vmem:[#allocation5 + $0x8c8] sm:$0xff]
    %v406 = vld [vmem:[#allocation5 + $0x8d0] sm:$0xff]
    %v407 = vld [vmem:[#allocation5 + $0x8d8] sm:$0xff]
    %v408 = vld [vmem:[#allocation5 + $0x8e0] sm:$0xff]
    %v409 = vld [vmem:[#allocation5 + $0x8e8] sm:$0xff]
    %v410 = vld [vmem:[#allocation5 + $0x8f0] sm:$0xff]
    %v411 = vld [vmem:[#allocation5 + $0x8f8] sm:$0xff]
    %v412 = vld [vmem:[#allocation7] sm:$0x3f]
    %v414 = vlaneseq
    %v415 = vshrl.u32 %v414, 7
    %v416 = vsub.s32 0, %v415
    %v417 = vrot.slane %v412, %v416
    %v418 = vlaneseq
    %v419 = vshrl.u32 %v418, 7
    %v420 = vsub.s32 1, %v419
    %v421 = vrot.slane %v412, %v420
    %v422 = vlaneseq
    %v423 = vshrl.u32 %v422, 7
    %v424 = vsub.s32 2, %v423
    %v425 = vrot.slane %v412, %v424
    %v426 = vlaneseq
    %v427 = vshrl.u32 %v426, 7
    %v428 = vsub.s32 3, %v427
    %v429 = vrot.slane %v412, %v428
    %v430 = vlaneseq
    %v431 = vshrl.u32 %v430, 7
    %v432 = vsub.s32 4, %v431
    %v433 = vrot.slane %v412, %v432
    %v434 = vlaneseq
    %v435 = vshrl.u32 %v434, 7
    %v436 = vsub.s32 5, %v435
    %v437 = vrot.slane %v412, %v436
    %v732 = vunpack.c.l.b16 %v124
    %v733 = vunpack.c.h.b16 %v124
    %v734 = vunpack.c.l.b16 %v125
    %v735 = vunpack.c.h.b16 %v125
    %v736 = vunpack.c.l.b16 %v126
    %v737 = vunpack.c.h.b16 %v126
    %v738 = vunpack.c.l.b16 %v127
    %v739 = vunpack.c.h.b16 %v127
    %v740 = vunpack.c.l.b16 %v128
    %v741 = vunpack.c.h.b16 %v128
    %v742 = vunpack.c.l.b16 %v129
    %v743 = vunpack.c.h.b16 %v129
    %v744 = vunpack.c.l.b16 %v130
    %v745 = vunpack.c.h.b16 %v130
    %v746 = vunpack.c.l.b16 %v131
    %v747 = vunpack.c.h.b16 %v131
    %v748 = vunpack.c.l.b16 %v132
    %v749 = vunpack.c.h.b16 %v132
    %v750 = vunpack.c.l.b16 %v133
    %v751 = vunpack.c.h.b16 %v133
    %v752 = vunpack.c.l.b16 %v134
    %v753 = vunpack.c.h.b16 %v134
    %v754 = vunpack.c.l.b16 %v135
    %v755 = vunpack.c.h.b16 %v135
    %v756 = vunpack.c.l.b16 %v136
    %v757 = vunpack.c.h.b16 %v136
    %v758 = vunpack.c.l.b16 %v137
    %v759 = vunpack.c.h.b16 %v137
    %v760 = vunpack.c.l.b16 %v138
    %v761 = vunpack.c.h.b16 %v138
    %v762 = vunpack.c.l.b16 %v139
    %v763 = vunpack.c.h.b16 %v139
    %v764 = vunpack.c.l.b16 %v140
    %v765 = vunpack.c.h.b16 %v140
    %v766 = vunpack.c.l.b16 %v141
    %v767 = vunpack.c.h.b16 %v141
    %v768 = vunpack.c.l.b16 %v142
    %v769 = vunpack.c.h.b16 %v142
    %v770 = vunpack.c.l.b16 %v143
    %v771 = vunpack.c.h.b16 %v143
    %v772 = vunpack.c.l.b16 %v144
    %v773 = vunpack.c.h.b16 %v144
    %v774 = vunpack.c.l.b16 %v145
    %v775 = vunpack.c.h.b16 %v145
    %v776 = vunpack.c.l.b16 %v146
    %v777 = vunpack.c.h.b16 %v146
    %v778 = vunpack.c.l.b16 %v147
    %v779 = vunpack.c.h.b16 %v147
    %v780 = vunpack.c.l.b16 %v148
    %v781 = vunpack.c.h.b16 %v148
    %v782 = vunpack.c.l.b16 %v149
    %v783 = vunpack.c.h.b16 %v149
    %v784 = vunpack.c.l.b16 %v150
    %v785 = vunpack.c.h.b16 %v150
    %v786 = vunpack.c.l.b16 %v151
    %v787 = vunpack.c.h.b16 %v151
    %v788 = vunpack.c.l.b16 %v152
    %v789 = vunpack.c.h.b16 %v152
    %v790 = vunpack.c.l.b16 %v153
    %v791 = vunpack.c.h.b16 %v153
    %v792 = vunpack.c.l.b16 %v154
    %v793 = vunpack.c.h.b16 %v154
    %v794 = vunpack.c.l.b16 %v155
    %v795 = vunpack.c.h.b16 %v155
    %v796 = vunpack.c.l.b16 %v156
    %v797 = vunpack.c.h.b16 %v156
    %v798 = vunpack.c.l.b16 %v157
    %v799 = vunpack.c.h.b16 %v157
    %v800 = vunpack.c.l.b16 %v158
    %v801 = vunpack.c.h.b16 %v158
    %v802 = vunpack.c.l.b16 %v159
    %v803 = vunpack.c.h.b16 %v159
    %v804 = vunpack.c.l.b16 %v160
    %v805 = vunpack.c.h.b16 %v160
    %v806 = vunpack.c.l.b16 %v161
    %v807 = vunpack.c.h.b16 %v161
    %v808 = vunpack.c.l.b16 %v162
    %v809 = vunpack.c.h.b16 %v162
    %v810 = vunpack.c.l.b16 %v163
    %v811 = vunpack.c.h.b16 %v163
    %v812 = vunpack.c.l.b16 %v164
    %v813 = vunpack.c.h.b16 %v164
    %v814 = vunpack.c.l.b16 %v165
    %v815 = vunpack.c.h.b16 %v165
    %v816 = vunpack.c.l.b16 %v166
    %v817 = vunpack.c.h.b16 %v166
    %v818 = vunpack.c.l.b16 %v167
    %v819 = vunpack.c.h.b16 %v167
    %v820 = vunpack.c.l.b16 %v168
    %v821 = vunpack.c.h.b16 %v168
    %v822 = vunpack.c.l.b16 %v169
    %v823 = vunpack.c.h.b16 %v169
    %v824 = vunpack.c.l.b16 %v170
    %v825 = vunpack.c.h.b16 %v170
    %v826 = vunpack.c.l.b16 %v171
    %v827 = vunpack.c.h.b16 %v171
    %v828 = vunpack.c.l.b16 %v172
    %v829 = vunpack.c.h.b16 %v172
    %v830 = vunpack.c.l.b16 %v173
    %v831 = vunpack.c.h.b16 %v173
    %v832 = vunpack.c.l.b16 %v174
    %v833 = vunpack.c.h.b16 %v174
    %v834 = vunpack.c.l.b16 %v175
    %v835 = vunpack.c.h.b16 %v175
    %v836 = vunpack.c.l.b16 %v176
    %v837 = vunpack.c.h.b16 %v176
    %v838 = vunpack.c.l.b16 %v177
    %v839 = vunpack.c.h.b16 %v177
    %v840 = vunpack.c.l.b16 %v178
    %v841 = vunpack.c.h.b16 %v178
    %v842 = vunpack.c.l.b16 %v179
    %v843 = vunpack.c.h.b16 %v179
    %v844 = vunpack.c.l.b16 %v180
    %v845 = vunpack.c.h.b16 %v180
    %v846 = vunpack.c.l.b16 %v181
    %v847 = vunpack.c.h.b16 %v181
    %v848 = vunpack.c.l.b16 %v182
    %v849 = vunpack.c.h.b16 %v182
    %v850 = vunpack.c.l.b16 %v183
    %v851 = vunpack.c.h.b16 %v183
    %v852 = vunpack.c.l.b16 %v184
    %v853 = vunpack.c.h.b16 %v184
    %v854 = vunpack.c.l.b16 %v185
    %v855 = vunpack.c.h.b16 %v185
    %v856 = vunpack.c.l.b16 %v186
    %v857 = vunpack.c.h.b16 %v186
    %v858 = vunpack.c.l.b16 %v187
    %v859 = vunpack.c.h.b16 %v187
    %v860 = vunpack.c.l.b16 %v188
    %v861 = vunpack.c.h.b16 %v188
    %v862 = vunpack.c.l.b16 %v189
    %v863 = vunpack.c.h.b16 %v189
    %v864 = vunpack.c.l.b16 %v190
    %v865 = vunpack.c.h.b16 %v190
    %v866 = vunpack.c.l.b16 %v191
    %v867 = vunpack.c.h.b16 %v191
    %v868 = vunpack.c.l.b16 %v192
    %v869 = vunpack.c.h.b16 %v192
    %v870 = vunpack.c.l.b16 %v193
    %v871 = vunpack.c.h.b16 %v193
    %v872 = vunpack.c.l.b16 %v194
    %v873 = vunpack.c.h.b16 %v194
    %v874 = vunpack.c.l.b16 %v195
    %v875 = vunpack.c.h.b16 %v195
    %v876 = vunpack.c.l.b16 %v196
    %v877 = vunpack.c.h.b16 %v196
    %v878 = vunpack.c.l.b16 %v197
    %v879 = vunpack.c.h.b16 %v197
    %v880 = vunpack.c.l.b16 %v198
    %v881 = vunpack.c.h.b16 %v198
    %v882 = vunpack.c.l.b16 %v199
    %v883 = vunpack.c.h.b16 %v199
    %v884 = vunpack.c.l.b16 %v200
    %v885 = vunpack.c.h.b16 %v200
    %v886 = vunpack.c.l.b16 %v201
    %v887 = vunpack.c.h.b16 %v201
    %v888 = vunpack.c.l.b16 %v202
    %v889 = vunpack.c.h.b16 %v202
    %v890 = vunpack.c.l.b16 %v203
    %v891 = vunpack.c.h.b16 %v203
    %v892 = vunpack.c.l.b16 %v204
    %v893 = vunpack.c.h.b16 %v204
    %v894 = vunpack.c.l.b16 %v205
    %v895 = vunpack.c.h.b16 %v205
    %v896 = vunpack.c.l.b16 %v206
    %v897 = vunpack.c.h.b16 %v206
    %v898 = vunpack.c.l.b16 %v207
    %v899 = vunpack.c.h.b16 %v207
    %v900 = vunpack.c.l.b16 %v208
    %v901 = vunpack.c.h.b16 %v208
    %v902 = vunpack.c.l.b16 %v209
    %v903 = vunpack.c.h.b16 %v209
    %v904 = vunpack.c.l.b16 %v210
    %v905 = vunpack.c.h.b16 %v210
    %v906 = vunpack.c.l.b16 %v211
    %v907 = vunpack.c.h.b16 %v211
    %v908 = vunpack.c.l.b16 %v212
    %v909 = vunpack.c.h.b16 %v212
    %v910 = vunpack.c.l.b16 %v213
    %v911 = vunpack.c.h.b16 %v213
    %v912 = vunpack.c.l.b16 %v214
    %v913 = vunpack.c.h.b16 %v214
    %v914 = vunpack.c.l.b16 %v215
    %v915 = vunpack.c.h.b16 %v215
    %v916 = vunpack.c.l.b16 %v216
    %v917 = vunpack.c.h.b16 %v216
    %v918 = vunpack.c.l.b16 %v217
    %v919 = vunpack.c.h.b16 %v217
    %v920 = vunpack.c.l.b16 %v218
    %v921 = vunpack.c.h.b16 %v218
    %v922 = vunpack.c.l.b16 %v219
    %v923 = vunpack.c.h.b16 %v219
    %v924 = vunpack.c.l.b16 %v220
    %v925 = vunpack.c.h.b16 %v220
    %v926 = vunpack.c.l.b16 %v221
    %v927 = vunpack.c.h.b16 %v221
    %v928 = vunpack.c.l.b16 %v222
    %v929 = vunpack.c.h.b16 %v222
    %v930 = vunpack.c.l.b16 %v223
    %v931 = vunpack.c.h.b16 %v223
    %v932 = vunpack.c.l.b16 %v224
    %v933 = vunpack.c.h.b16 %v224
    %v934 = vunpack.c.l.b16 %v225
    %v935 = vunpack.c.h.b16 %v225
    %v936 = vunpack.c.l.b16 %v226
    %v937 = vunpack.c.h.b16 %v226
    %v938 = vunpack.c.l.b16 %v227
    %v939 = vunpack.c.h.b16 %v227
    %v940 = vunpack.c.l.b16 %v228
    %v941 = vunpack.c.h.b16 %v228
    %v942 = vunpack.c.l.b16 %v229
    %v943 = vunpack.c.h.b16 %v229
    %v944 = vunpack.c.l.b16 %v230
    %v945 = vunpack.c.h.b16 %v230
    %v946 = vunpack.c.l.b16 %v231
    %v947 = vunpack.c.h.b16 %v231
    %v948 = vunpack.c.l.b16 %v232
    %v949 = vunpack.c.h.b16 %v232
    %v950 = vunpack.c.l.b16 %v233
    %v951 = vunpack.c.h.b16 %v233
    %v952 = vunpack.c.l.b16 %v234
    %v953 = vunpack.c.h.b16 %v234
    %v954 = vunpack.c.l.b16 %v235
    %v955 = vunpack.c.h.b16 %v235
    %v956 = vunpack.c.l.b16 %v236
    %v957 = vunpack.c.h.b16 %v236
    %v958 = vunpack.c.l.b16 %v237
    %v959 = vunpack.c.h.b16 %v237
    %v960 = vunpack.c.l.b16 %v238
    %v961 = vunpack.c.h.b16 %v238
    %v962 = vunpack.c.l.b16 %v239
    %v963 = vunpack.c.h.b16 %v239
    %v964 = vunpack.c.l.b16 %v240
    %v965 = vunpack.c.h.b16 %v240
    %v966 = vunpack.c.l.b16 %v241
    %v967 = vunpack.c.h.b16 %v241
    %v968 = vunpack.c.l.b16 %v242
    %v969 = vunpack.c.h.b16 %v242
    %v970 = vunpack.c.l.b16 %v243
    %v971 = vunpack.c.h.b16 %v243
    %v972 = vunpack.c.l.b16 %v244
    %v973 = vunpack.c.h.b16 %v244
    %v974 = vunpack.c.l.b16 %v245
    %v975 = vunpack.c.h.b16 %v245
    %v976 = vunpack.c.l.b16 %v246
    %v977 = vunpack.c.h.b16 %v246
    %v978 = vunpack.c.l.b16 %v247
    %v979 = vunpack.c.h.b16 %v247
    %v980 = vunpack.c.l.b16 %v248
    %v981 = vunpack.c.h.b16 %v248
    %v982 = vunpack.c.l.b16 %v249
    %v983 = vunpack.c.h.b16 %v249
    %v984 = vunpack.c.l.b16 %v250
    %v985 = vunpack.c.h.b16 %v250
    %v986 = vunpack.c.l.b16 %v251
    %v987 = vunpack.c.h.b16 %v251
    %v988 = vunpack.c.l.b16 %v252
    %v989 = vunpack.c.h.b16 %v252
    %v990 = vunpack.c.l.b16 %v253
    %v991 = vunpack.c.h.b16 %v253
    %v992 = vunpack.c.l.b16 %v254
    %v993 = vunpack.c.h.b16 %v254
    %v994 = vunpack.c.l.b16 %v255
    %v995 = vunpack.c.h.b16 %v255
    %v996 = vunpack.c.l.b16 %v256
    %v997 = vunpack.c.h.b16 %v256
    %v998 = vunpack.c.l.b16 %v257
    %v999 = vunpack.c.h.b16 %v257
    %v1000 = vunpack.c.l.b16 %v258
    %v1001 = vunpack.c.h.b16 %v258
    %v1002 = vunpack.c.l.b16 %v259
    %v1003 = vunpack.c.h.b16 %v259
    %v1004 = vunpack.c.l.b16 %v260
    %v1005 = vunpack.c.h.b16 %v260
    %v1006 = vunpack.c.l.b16 %v261
    %v1007 = vunpack.c.h.b16 %v261
    %v1008 = vunpack.c.l.b16 %v262
    %v1009 = vunpack.c.h.b16 %v262
    %v1010 = vunpack.c.l.b16 %v263
    %v1011 = vunpack.c.h.b16 %v263
    %v1012 = vunpack.c.l.b16 %v264
    %v1013 = vunpack.c.h.b16 %v264
    %v1014 = vunpack.c.l.b16 %v265
    %v1015 = vunpack.c.h.b16 %v265
    %v1016 = vunpack.c.l.b16 %v266
    %v1017 = vunpack.c.h.b16 %v266
    %v1018 = vunpack.c.l.b16 %v267
    %v1019 = vunpack.c.h.b16 %v267
    %v1020 = vunpack.c.l.b16 %v268
    %v1021 = vunpack.c.h.b16 %v268
    %v1022 = vunpack.c.l.b16 %v269
    %v1023 = vunpack.c.h.b16 %v269
    %v1024 = vunpack.c.l.b16 %v270
    %v1025 = vunpack.c.h.b16 %v270
    %v1026 = vunpack.c.l.b16 %v271
    %v1027 = vunpack.c.h.b16 %v271
    %v1028 = vunpack.c.l.b16 %v272
    %v1029 = vunpack.c.h.b16 %v272
    %v1030 = vunpack.c.l.b16 %v273
    %v1031 = vunpack.c.h.b16 %v273
    %v1032 = vunpack.c.l.b16 %v274
    %v1033 = vunpack.c.h.b16 %v274
    %v1034 = vunpack.c.l.b16 %v275
    %v1035 = vunpack.c.h.b16 %v275
    %v1036 = vunpack.c.l.b16 %v276
    %v1037 = vunpack.c.h.b16 %v276
    %v1038 = vunpack.c.l.b16 %v277
    %v1039 = vunpack.c.h.b16 %v277
    %v1040 = vunpack.c.l.b16 %v278
    %v1041 = vunpack.c.h.b16 %v278
    %v1042 = vunpack.c.l.b16 %v279
    %v1043 = vunpack.c.h.b16 %v279
    %v1044 = vunpack.c.l.b16 %v280
    %v1045 = vunpack.c.h.b16 %v280
    %v1046 = vunpack.c.l.b16 %v281
    %v1047 = vunpack.c.h.b16 %v281
    %v1048 = vunpack.c.l.b16 %v282
    %v1049 = vunpack.c.h.b16 %v282
    %v1050 = vunpack.c.l.b16 %v283
    %v1051 = vunpack.c.h.b16 %v283
    %v1052 = vunpack.c.l.b16 %v284
    %v1053 = vunpack.c.h.b16 %v284
    %v1054 = vunpack.c.l.b16 %v285
    %v1055 = vunpack.c.h.b16 %v285
    %v1056 = vunpack.c.l.b16 %v286
    %v1057 = vunpack.c.h.b16 %v286
    %v1058 = vunpack.c.l.b16 %v287
    %v1059 = vunpack.c.h.b16 %v287
    %v1060 = vunpack.c.l.b16 %v288
    %v1061 = vunpack.c.h.b16 %v288
    %v1062 = vunpack.c.l.b16 %v289
    %v1063 = vunpack.c.h.b16 %v289
    %v1064 = vunpack.c.l.b16 %v290
    %v1065 = vunpack.c.h.b16 %v290
    %v1066 = vunpack.c.l.b16 %v291
    %v1067 = vunpack.c.h.b16 %v291
    %v1068 = vunpack.c.l.b16 %v292
    %v1069 = vunpack.c.h.b16 %v292
    %v1070 = vunpack.c.l.b16 %v293
    %v1071 = vunpack.c.h.b16 %v293
    %v1072 = vunpack.c.l.b16 %v294
    %v1073 = vunpack.c.h.b16 %v294
    %v1074 = vunpack.c.l.b16 %v295
    %v1075 = vunpack.c.h.b16 %v295
    %v1076 = vunpack.c.l.b16 %v296
    %v1077 = vunpack.c.h.b16 %v296
    %v1078 = vunpack.c.l.b16 %v297
    %v1079 = vunpack.c.h.b16 %v297
    %v1080 = vunpack.c.l.b16 %v298
    %v1081 = vunpack.c.h.b16 %v298
    %v1082 = vunpack.c.l.b16 %v299
    %v1083 = vunpack.c.h.b16 %v299
    %v1084 = vunpack.c.l.b16 %v300
    %v1085 = vunpack.c.h.b16 %v300
    %v1086 = vunpack.c.l.b16 %v301
    %v1087 = vunpack.c.h.b16 %v301
    %v1088 = vunpack.c.l.b16 %v302
    %v1089 = vunpack.c.h.b16 %v302
    %v1090 = vunpack.c.l.b16 %v303
    %v1091 = vunpack.c.h.b16 %v303
    %v1092 = vunpack.c.l.b16 %v304
    %v1093 = vunpack.c.h.b16 %v304
    %v1094 = vunpack.c.l.b16 %v305
    %v1095 = vunpack.c.h.b16 %v305
    %v1096 = vunpack.c.l.b16 %v306
    %v1097 = vunpack.c.h.b16 %v306
    %v1098 = vunpack.c.l.b16 %v307
    %v1099 = vunpack.c.h.b16 %v307
    %v1100 = vunpack.c.l.b16 %v308
    %v1101 = vunpack.c.h.b16 %v308
    %v1102 = vunpack.c.l.b16 %v309
    %v1103 = vunpack.c.h.b16 %v309
    %v1104 = vunpack.c.l.b16 %v310
    %v1105 = vunpack.c.h.b16 %v310
    %v1106 = vunpack.c.l.b16 %v311
    %v1107 = vunpack.c.h.b16 %v311
    %v1108 = vunpack.c.l.b16 %v312
    %v1109 = vunpack.c.h.b16 %v312
    %v1110 = vunpack.c.l.b16 %v313
    %v1111 = vunpack.c.h.b16 %v313
    %v1112 = vunpack.c.l.b16 %v314
    %v1113 = vunpack.c.h.b16 %v314
    %v1114 = vunpack.c.l.b16 %v315
    %v1115 = vunpack.c.h.b16 %v315
    %v1116 = vunpack.c.l.b16 %v316
    %v1117 = vunpack.c.h.b16 %v316
    %v1118 = vunpack.c.l.b16 %v317
    %v1119 = vunpack.c.h.b16 %v317
    %v1120 = vunpack.c.l.b16 %v318
    %v1121 = vunpack.c.h.b16 %v318
    %v1122 = vunpack.c.l.b16 %v319
    %v1123 = vunpack.c.h.b16 %v319
    %v1124 = vunpack.c.l.b16 %v320
    %v1125 = vunpack.c.h.b16 %v320
    %v1126 = vunpack.c.l.b16 %v321
    %v1127 = vunpack.c.h.b16 %v321
    %v1128 = vunpack.c.l.b16 %v322
    %v1129 = vunpack.c.h.b16 %v322
    %v1130 = vunpack.c.l.b16 %v323
    %v1131 = vunpack.c.h.b16 %v323
    %v1132 = vunpack.c.l.b16 %v324
    %v1133 = vunpack.c.h.b16 %v324
    %v1134 = vunpack.c.l.b16 %v325
    %v1135 = vunpack.c.h.b16 %v325
    %v1136 = vunpack.c.l.b16 %v326
    %v1137 = vunpack.c.h.b16 %v326
    %v1138 = vunpack.c.l.b16 %v327
    %v1139 = vunpack.c.h.b16 %v327
    %v1140 = vunpack.c.l.b16 %v328
    %v1141 = vunpack.c.h.b16 %v328
    %v1142 = vunpack.c.l.b16 %v329
    %v1143 = vunpack.c.h.b16 %v329
    %v1144 = vunpack.c.l.b16 %v330
    %v1145 = vunpack.c.h.b16 %v330
    %v1146 = vunpack.c.l.b16 %v331
    %v1147 = vunpack.c.h.b16 %v331
    %v1148 = vunpack.c.l.b16 %v332
    %v1149 = vunpack.c.h.b16 %v332
    %v1150 = vunpack.c.l.b16 %v333
    %v1151 = vunpack.c.h.b16 %v333
    %v1152 = vunpack.c.l.b16 %v334
    %v1153 = vunpack.c.h.b16 %v334
    %v1154 = vunpack.c.l.b16 %v335
    %v1155 = vunpack.c.h.b16 %v335
    %v1156 = vunpack.c.l.b16 %v336
    %v1157 = vunpack.c.h.b16 %v336
    %v1158 = vunpack.c.l.b16 %v337
    %v1159 = vunpack.c.h.b16 %v337
    %v1160 = vunpack.c.l.b16 %v338
    %v1161 = vunpack.c.h.b16 %v338
    %v1162 = vunpack.c.l.b16 %v339
    %v1163 = vunpack.c.h.b16 %v339
    %v1164 = vunpack.c.l.b16 %v340
    %v1165 = vunpack.c.h.b16 %v340
    %v1166 = vunpack.c.l.b16 %v341
    %v1167 = vunpack.c.h.b16 %v341
    %v1168 = vunpack.c.l.b16 %v342
    %v1169 = vunpack.c.h.b16 %v342
    %v1170 = vunpack.c.l.b16 %v343
    %v1171 = vunpack.c.h.b16 %v343
    %v1172 = vunpack.c.l.b16 %v344
    %v1173 = vunpack.c.h.b16 %v344
    %v1174 = vunpack.c.l.b16 %v345
    %v1175 = vunpack.c.h.b16 %v345
    %v1176 = vunpack.c.l.b16 %v346
    %v1177 = vunpack.c.h.b16 %v346
    %v1178 = vunpack.c.l.b16 %v347
    %v1179 = vunpack.c.h.b16 %v347
    %v1180 = vunpack.c.l.b16 %v348
    %v1181 = vunpack.c.h.b16 %v348
    %v1182 = vunpack.c.l.b16 %v349
    %v1183 = vunpack.c.h.b16 %v349
    %v1184 = vunpack.c.l.b16 %v350
    %v1185 = vunpack.c.h.b16 %v350
    %v1186 = vunpack.c.l.b16 %v351
    %v1187 = vunpack.c.h.b16 %v351
    %v1188 = vunpack.c.l.b16 %v352
    %v1189 = vunpack.c.h.b16 %v352
    %v1190 = vunpack.c.l.b16 %v353
    %v1191 = vunpack.c.h.b16 %v353
    %v1192 = vunpack.c.l.b16 %v354
    %v1193 = vunpack.c.h.b16 %v354
    %v1194 = vunpack.c.l.b16 %v355
    %v1195 = vunpack.c.h.b16 %v355
    %v1196 = vunpack.c.l.b16 %v356
    %v1197 = vunpack.c.h.b16 %v356
    %v1198 = vunpack.c.l.b16 %v357
    %v1199 = vunpack.c.h.b16 %v357
    %v1200 = vunpack.c.l.b16 %v358
    %v1201 = vunpack.c.h.b16 %v358
    %v1202 = vunpack.c.l.b16 %v359
    %v1203 = vunpack.c.h.b16 %v359
    %v1204 = vunpack.c.l.b16 %v360
    %v1205 = vunpack.c.h.b16 %v360
    %v1206 = vunpack.c.l.b16 %v361
    %v1207 = vunpack.c.h.b16 %v361
    %v1208 = vunpack.c.l.b16 %v362
    %v1209 = vunpack.c.h.b16 %v362
    %v1210 = vunpack.c.l.b16 %v363
    %v1211 = vunpack.c.h.b16 %v363
    %v1212 = vunpack.c.l.b16 %v364
    %v1213 = vunpack.c.h.b16 %v364
    %v1214 = vunpack.c.l.b16 %v365
    %v1215 = vunpack.c.h.b16 %v365
    %v1216 = vunpack.c.l.b16 %v366
    %v1217 = vunpack.c.h.b16 %v366
    %v1218 = vunpack.c.l.b16 %v367
    %v1219 = vunpack.c.h.b16 %v367
    %v1220 = vunpack.c.l.b16 %v368
    %v1221 = vunpack.c.h.b16 %v368
    %v1222 = vunpack.c.l.b16 %v369
    %v1223 = vunpack.c.h.b16 %v369
    %v1224 = vunpack.c.l.b16 %v370
    %v1225 = vunpack.c.h.b16 %v370
    %v1226 = vunpack.c.l.b16 %v371
    %v1227 = vunpack.c.h.b16 %v371
    %v1228 = vunpack.c.l.b16 %v372
    %v1229 = vunpack.c.h.b16 %v372
    %v1230 = vunpack.c.l.b16 %v373
    %v1231 = vunpack.c.h.b16 %v373
    %v1232 = vunpack.c.l.b16 %v374
    %v1233 = vunpack.c.h.b16 %v374
    %v1234 = vunpack.c.l.b16 %v375
    %v1235 = vunpack.c.h.b16 %v375
    %v1236 = vunpack.c.l.b16 %v376
    %v1237 = vunpack.c.h.b16 %v376
    %v1238 = vunpack.c.l.b16 %v377
    %v1239 = vunpack.c.h.b16 %v377
    %v1240 = vunpack.c.l.b16 %v378
    %v1241 = vunpack.c.h.b16 %v378
    %v1242 = vunpack.c.l.b16 %v379
    %v1243 = vunpack.c.h.b16 %v379
    %v1244 = vunpack.c.l.b16 %v380
    %v1245 = vunpack.c.h.b16 %v380
    %v1246 = vunpack.c.l.b16 %v381
    %v1247 = vunpack.c.h.b16 %v381
    %v1248 = vunpack.c.l.b16 %v382
    %v1249 = vunpack.c.h.b16 %v382
    %v1250 = vunpack.c.l.b16 %v383
    %v1251 = vunpack.c.h.b16 %v383
    %v1252 = vunpack.c.l.b16 %v384
    %v1253 = vunpack.c.h.b16 %v384
    %v1254 = vunpack.c.l.b16 %v385
    %v1255 = vunpack.c.h.b16 %v385
    %v1256 = vunpack.c.l.b16 %v386
    %v1257 = vunpack.c.h.b16 %v386
    %v1258 = vunpack.c.l.b16 %v387
    %v1259 = vunpack.c.h.b16 %v387
    %v1260 = vunpack.c.l.b16 %v388
    %v1261 = vunpack.c.h.b16 %v388
    %v1262 = vunpack.c.l.b16 %v389
    %v1263 = vunpack.c.h.b16 %v389
    %v1264 = vunpack.c.l.b16 %v390
    %v1265 = vunpack.c.h.b16 %v390
    %v1266 = vunpack.c.l.b16 %v391
    %v1267 = vunpack.c.h.b16 %v391
    %v1268 = vunpack.c.l.b16 %v392
    %v1269 = vunpack.c.h.b16 %v392
    %v1270 = vunpack.c.l.b16 %v393
    %v1271 = vunpack.c.h.b16 %v393
    %v1272 = vunpack.c.l.b16 %v394
    %v1273 = vunpack.c.h.b16 %v394
    %v1274 = vunpack.c.l.b16 %v395
    %v1275 = vunpack.c.h.b16 %v395
    %v1276 = vunpack.c.l.b16 %v396
    %v1277 = vunpack.c.h.b16 %v396
    %v1278 = vunpack.c.l.b16 %v397
    %v1279 = vunpack.c.h.b16 %v397
    %v1280 = vunpack.c.l.b16 %v398
    %v1281 = vunpack.c.h.b16 %v398
    %v1282 = vunpack.c.l.b16 %v399
    %v1283 = vunpack.c.h.b16 %v399
    %v1284 = vunpack.c.l.b16 %v400
    %v1285 = vunpack.c.h.b16 %v400
    %v1286 = vunpack.c.l.b16 %v401
    %v1287 = vunpack.c.h.b16 %v401
    %v1288 = vunpack.c.l.b16 %v402
    %v1289 = vunpack.c.h.b16 %v402
    %v1290 = vunpack.c.l.b16 %v403
    %v1291 = vunpack.c.h.b16 %v403
    %v1292 = vunpack.c.l.b16 %v404
    %v1293 = vunpack.c.h.b16 %v404
    %v1294 = vunpack.c.l.b16 %v405
    %v1295 = vunpack.c.h.b16 %v405
    %v1296 = vunpack.c.l.b16 %v406
    %v1297 = vunpack.c.h.b16 %v406
    %v1298 = vunpack.c.l.b16 %v407
    %v1299 = vunpack.c.h.b16 %v407
    %v1300 = vunpack.c.l.b16 %v408
    %v1301 = vunpack.c.h.b16 %v408
    %v1302 = vunpack.c.l.b16 %v409
    %v1303 = vunpack.c.h.b16 %v409
    %v1304 = vunpack.c.l.b16 %v410
    %v1305 = vunpack.c.h.b16 %v410
    %v1306 = vunpack.c.l.b16 %v411
    %v1307 = vunpack.c.h.b16 %v411
    %v1308 = vpack.c.b16 %v738, %v732
    %v1309 = vpack.c.b16 %v739, %v733
    %v1310 = vpack.c.b16 %v740, %v734
    %v1311 = vpack.c.b16 %v741, %v735
    %v1312 = vpack.c.b16 %v742, %v736
    %v1313 = vpack.c.b16 %v743, %v737
    %v1314 = vpack.c.b16 %v750, %v744
    %v1315 = vpack.c.b16 %v751, %v745
    %v1316 = vpack.c.b16 %v752, %v746
    %v1317 = vpack.c.b16 %v753, %v747
    %v1318 = vpack.c.b16 %v754, %v748
    %v1319 = vpack.c.b16 %v755, %v749
    %v1320 = vpack.c.b16 %v762, %v756
    %v1321 = vpack.c.b16 %v763, %v757
    %v1322 = vpack.c.b16 %v764, %v758
    %v1323 = vpack.c.b16 %v765, %v759
    %v1324 = vpack.c.b16 %v766, %v760
    %v1325 = vpack.c.b16 %v767, %v761
    %v1326 = vpack.c.b16 %v774, %v768
    %v1327 = vpack.c.b16 %v775, %v769
    %v1328 = vpack.c.b16 %v776, %v770
    %v1329 = vpack.c.b16 %v777, %v771
    %v1330 = vpack.c.b16 %v778, %v772
    %v1331 = vpack.c.b16 %v779, %v773
    %v1332 = vpack.c.b16 %v786, %v780
    %v1333 = vpack.c.b16 %v787, %v781
    %v1334 = vpack.c.b16 %v788, %v782
    %v1335 = vpack.c.b16 %v789, %v783
    %v1336 = vpack.c.b16 %v790, %v784
    %v1337 = vpack.c.b16 %v791, %v785
    %v1338 = vpack.c.b16 %v798, %v792
    %v1339 = vpack.c.b16 %v799, %v793
    %v1340 = vpack.c.b16 %v800, %v794
    %v1341 = vpack.c.b16 %v801, %v795
    %v1342 = vpack.c.b16 %v802, %v796
    %v1343 = vpack.c.b16 %v803, %v797
    %v1344 = vpack.c.b16 %v810, %v804
    %v1345 = vpack.c.b16 %v811, %v805
    %v1346 = vpack.c.b16 %v812, %v806
    %v1347 = vpack.c.b16 %v813, %v807
    %v1348 = vpack.c.b16 %v814, %v808
    %v1349 = vpack.c.b16 %v815, %v809
    %v1350 = vpack.c.b16 %v822, %v816
    %v1351 = vpack.c.b16 %v823, %v817
    %v1352 = vpack.c.b16 %v824, %v818
    %v1353 = vpack.c.b16 %v825, %v819
    %v1354 = vpack.c.b16 %v826, %v820
    %v1355 = vpack.c.b16 %v827, %v821
    %v1356 = vpack.c.b16 %v834, %v828
    %v1357 = vpack.c.b16 %v835, %v829
    %v1358 = vpack.c.b16 %v836, %v830
    %v1359 = vpack.c.b16 %v837, %v831
    %v1360 = vpack.c.b16 %v838, %v832
    %v1361 = vpack.c.b16 %v839, %v833
    %v1362 = vpack.c.b16 %v846, %v840
    %v1363 = vpack.c.b16 %v847, %v841
    %v1364 = vpack.c.b16 %v848, %v842
    %v1365 = vpack.c.b16 %v849, %v843
    %v1366 = vpack.c.b16 %v850, %v844
    %v1367 = vpack.c.b16 %v851, %v845
    %v1368 = vpack.c.b16 %v858, %v852
    %v1369 = vpack.c.b16 %v859, %v853
    %v1370 = vpack.c.b16 %v860, %v854
    %v1371 = vpack.c.b16 %v861, %v855
    %v1372 = vpack.c.b16 %v862, %v856
    %v1373 = vpack.c.b16 %v863, %v857
    %v1374 = vpack.c.b16 %v870, %v864
    %v1375 = vpack.c.b16 %v871, %v865
    %v1376 = vpack.c.b16 %v872, %v866
    %v1377 = vpack.c.b16 %v873, %v867
    %v1378 = vpack.c.b16 %v874, %v868
    %v1379 = vpack.c.b16 %v875, %v869
    %v1380 = vpack.c.b16 %v882, %v876
    %v1381 = vpack.c.b16 %v883, %v877
    %v1382 = vpack.c.b16 %v884, %v878
    %v1383 = vpack.c.b16 %v885, %v879
    %v1384 = vpack.c.b16 %v886, %v880
    %v1385 = vpack.c.b16 %v887, %v881
    %v1386 = vpack.c.b16 %v894, %v888
    %v1387 = vpack.c.b16 %v895, %v889
    %v1388 = vpack.c.b16 %v896, %v890
    %v1389 = vpack.c.b16 %v897, %v891
    %v1390 = vpack.c.b16 %v898, %v892
    %v1391 = vpack.c.b16 %v899, %v893
    %v1392 = vpack.c.b16 %v906, %v900
    %v1393 = vpack.c.b16 %v907, %v901
    %v1394 = vpack.c.b16 %v908, %v902
    %v1395 = vpack.c.b16 %v909, %v903
    %v1396 = vpack.c.b16 %v910, %v904
    %v1397 = vpack.c.b16 %v911, %v905
    %v1398 = vpack.c.b16 %v918, %v912
    %v1399 = vpack.c.b16 %v919, %v913
    %v1400 = vpack.c.b16 %v920, %v914
    %v1401 = vpack.c.b16 %v921, %v915
    %v1402 = vpack.c.b16 %v922, %v916
    %v1403 = vpack.c.b16 %v923, %v917
    %v1404 = vpack.c.b16 %v930, %v924
    %v1405 = vpack.c.b16 %v931, %v925
    %v1406 = vpack.c.b16 %v932, %v926
    %v1407 = vpack.c.b16 %v933, %v927
    %v1408 = vpack.c.b16 %v934, %v928
    %v1409 = vpack.c.b16 %v935, %v929
    %v1410 = vpack.c.b16 %v942, %v936
    %v1411 = vpack.c.b16 %v943, %v937
    %v1412 = vpack.c.b16 %v944, %v938
    %v1413 = vpack.c.b16 %v945, %v939
    %v1414 = vpack.c.b16 %v946, %v940
    %v1415 = vpack.c.b16 %v947, %v941
    %v1416 = vpack.c.b16 %v954, %v948
    %v1417 = vpack.c.b16 %v955, %v949
    %v1418 = vpack.c.b16 %v956, %v950
    %v1419 = vpack.c.b16 %v957, %v951
    %v1420 = vpack.c.b16 %v958, %v952
    %v1421 = vpack.c.b16 %v959, %v953
    %v1422 = vpack.c.b16 %v966, %v960
    %v1423 = vpack.c.b16 %v967, %v961
    %v1424 = vpack.c.b16 %v968, %v962
    %v1425 = vpack.c.b16 %v969, %v963
    %v1426 = vpack.c.b16 %v970, %v964
    %v1427 = vpack.c.b16 %v971, %v965
    %v1428 = vpack.c.b16 %v978, %v972
    %v1429 = vpack.c.b16 %v979, %v973
    %v1430 = vpack.c.b16 %v980, %v974
    %v1431 = vpack.c.b16 %v981, %v975
    %v1432 = vpack.c.b16 %v982, %v976
    %v1433 = vpack.c.b16 %v983, %v977
    %v1434 = vpack.c.b16 %v990, %v984
    %v1435 = vpack.c.b16 %v991, %v985
    %v1436 = vpack.c.b16 %v992, %v986
    %v1437 = vpack.c.b16 %v993, %v987
    %v1438 = vpack.c.b16 %v994, %v988
    %v1439 = vpack.c.b16 %v995, %v989
    %v1440 = vpack.c.b16 %v1002, %v996
    %v1441 = vpack.c.b16 %v1003, %v997
    %v1442 = vpack.c.b16 %v1004, %v998
    %v1443 = vpack.c.b16 %v1005, %v999
    %v1444 = vpack.c.b16 %v1006, %v1000
    %v1445 = vpack.c.b16 %v1007, %v1001
    %v1446 = vpack.c.b16 %v1014, %v1008
    %v1447 = vpack.c.b16 %v1015, %v1009
    %v1448 = vpack.c.b16 %v1016, %v1010
    %v1449 = vpack.c.b16 %v1017, %v1011
    %v1450 = vpack.c.b16 %v1018, %v1012
    %v1451 = vpack.c.b16 %v1019, %v1013
    %v1452 = vpack.c.b16 %v1026, %v1020
    %v1453 = vpack.c.b16 %v1027, %v1021
    %v1454 = vpack.c.b16 %v1028, %v1022
    %v1455 = vpack.c.b16 %v1029, %v1023
    %v1456 = vpack.c.b16 %v1030, %v1024
    %v1457 = vpack.c.b16 %v1031, %v1025
    %v1458 = vpack.c.b16 %v1038, %v1032
    %v1459 = vpack.c.b16 %v1039, %v1033
    %v1460 = vpack.c.b16 %v1040, %v1034
    %v1461 = vpack.c.b16 %v1041, %v1035
    %v1462 = vpack.c.b16 %v1042, %v1036
    %v1463 = vpack.c.b16 %v1043, %v1037
    %v1464 = vpack.c.b16 %v1050, %v1044
    %v1465 = vpack.c.b16 %v1051, %v1045
    %v1466 = vpack.c.b16 %v1052, %v1046
    %v1467 = vpack.c.b16 %v1053, %v1047
    %v1468 = vpack.c.b16 %v1054, %v1048
    %v1469 = vpack.c.b16 %v1055, %v1049
    %v1470 = vpack.c.b16 %v1062, %v1056
    %v1471 = vpack.c.b16 %v1063, %v1057
    %v1472 = vpack.c.b16 %v1064, %v1058
    %v1473 = vpack.c.b16 %v1065, %v1059
    %v1474 = vpack.c.b16 %v1066, %v1060
    %v1475 = vpack.c.b16 %v1067, %v1061
    %v1476 = vpack.c.b16 %v1074, %v1068
    %v1477 = vpack.c.b16 %v1075, %v1069
    %v1478 = vpack.c.b16 %v1076, %v1070
    %v1479 = vpack.c.b16 %v1077, %v1071
    %v1480 = vpack.c.b16 %v1078, %v1072
    %v1481 = vpack.c.b16 %v1079, %v1073
    %v1482 = vpack.c.b16 %v1086, %v1080
    %v1483 = vpack.c.b16 %v1087, %v1081
    %v1484 = vpack.c.b16 %v1088, %v1082
    %v1485 = vpack.c.b16 %v1089, %v1083
    %v1486 = vpack.c.b16 %v1090, %v1084
    %v1487 = vpack.c.b16 %v1091, %v1085
    %v1488 = vpack.c.b16 %v1098, %v1092
    %v1489 = vpack.c.b16 %v1099, %v1093
    %v1490 = vpack.c.b16 %v1100, %v1094
    %v1491 = vpack.c.b16 %v1101, %v1095
    %v1492 = vpack.c.b16 %v1102, %v1096
    %v1493 = vpack.c.b16 %v1103, %v1097
    %v1494 = vpack.c.b16 %v1110, %v1104
    %v1495 = vpack.c.b16 %v1111, %v1105
    %v1496 = vpack.c.b16 %v1112, %v1106
    %v1497 = vpack.c.b16 %v1113, %v1107
    %v1498 = vpack.c.b16 %v1114, %v1108
    %v1499 = vpack.c.b16 %v1115, %v1109
    %v1500 = vpack.c.b16 %v1122, %v1116
    %v1501 = vpack.c.b16 %v1123, %v1117
    %v1502 = vpack.c.b16 %v1124, %v1118
    %v1503 = vpack.c.b16 %v1125, %v1119
    %v1504 = vpack.c.b16 %v1126, %v1120
    %v1505 = vpack.c.b16 %v1127, %v1121
    %v1506 = vpack.c.b16 %v1134, %v1128
    %v1507 = vpack.c.b16 %v1135, %v1129
    %v1508 = vpack.c.b16 %v1136, %v1130
    %v1509 = vpack.c.b16 %v1137, %v1131
    %v1510 = vpack.c.b16 %v1138, %v1132
    %v1511 = vpack.c.b16 %v1139, %v1133
    %v1512 = vpack.c.b16 %v1146, %v1140
    %v1513 = vpack.c.b16 %v1147, %v1141
    %v1514 = vpack.c.b16 %v1148, %v1142
    %v1515 = vpack.c.b16 %v1149, %v1143
    %v1516 = vpack.c.b16 %v1150, %v1144
    %v1517 = vpack.c.b16 %v1151, %v1145
    %v1518 = vpack.c.b16 %v1158, %v1152
    %v1519 = vpack.c.b16 %v1159, %v1153
    %v1520 = vpack.c.b16 %v1160, %v1154
    %v1521 = vpack.c.b16 %v1161, %v1155
    %v1522 = vpack.c.b16 %v1162, %v1156
    %v1523 = vpack.c.b16 %v1163, %v1157
    %v1524 = vpack.c.b16 %v1170, %v1164
    %v1525 = vpack.c.b16 %v1171, %v1165
    %v1526 = vpack.c.b16 %v1172, %v1166
    %v1527 = vpack.c.b16 %v1173, %v1167
    %v1528 = vpack.c.b16 %v1174, %v1168
    %v1529 = vpack.c.b16 %v1175, %v1169
    %v1530 = vpack.c.b16 %v1182, %v1176
    %v1531 = vpack.c.b16 %v1183, %v1177
    %v1532 = vpack.c.b16 %v1184, %v1178
    %v1533 = vpack.c.b16 %v1185, %v1179
    %v1534 = vpack.c.b16 %v1186, %v1180
    %v1535 = vpack.c.b16 %v1187, %v1181
    %v1536 = vpack.c.b16 %v1194, %v1188
    %v1537 = vpack.c.b16 %v1195, %v1189
    %v1538 = vpack.c.b16 %v1196, %v1190
    %v1539 = vpack.c.b16 %v1197, %v1191
    %v1540 = vpack.c.b16 %v1198, %v1192
    %v1541 = vpack.c.b16 %v1199, %v1193
    %v1542 = vpack.c.b16 %v1206, %v1200
    %v1543 = vpack.c.b16 %v1207, %v1201
    %v1544 = vpack.c.b16 %v1208, %v1202
    %v1545 = vpack.c.b16 %v1209, %v1203
    %v1546 = vpack.c.b16 %v1210, %v1204
    %v1547 = vpack.c.b16 %v1211, %v1205
    %v1548 = vpack.c.b16 %v1218, %v1212
    %v1549 = vpack.c.b16 %v1219, %v1213
    %v1550 = vpack.c.b16 %v1220, %v1214
    %v1551 = vpack.c.b16 %v1221, %v1215
    %v1552 = vpack.c.b16 %v1222, %v1216
    %v1553 = vpack.c.b16 %v1223, %v1217
    %v1554 = vpack.c.b16 %v1230, %v1224
    %v1555 = vpack.c.b16 %v1231, %v1225
    %v1556 = vpack.c.b16 %v1232, %v1226
    %v1557 = vpack.c.b16 %v1233, %v1227
    %v1558 = vpack.c.b16 %v1234, %v1228
    %v1559 = vpack.c.b16 %v1235, %v1229
    %v1560 = vpack.c.b16 %v1242, %v1236
    %v1561 = vpack.c.b16 %v1243, %v1237
    %v1562 = vpack.c.b16 %v1244, %v1238
    %v1563 = vpack.c.b16 %v1245, %v1239
    %v1564 = vpack.c.b16 %v1246, %v1240
    %v1565 = vpack.c.b16 %v1247, %v1241
    %v1566 = vpack.c.b16 %v1254, %v1248
    %v1567 = vpack.c.b16 %v1255, %v1249
    %v1568 = vpack.c.b16 %v1256, %v1250
    %v1569 = vpack.c.b16 %v1257, %v1251
    %v1570 = vpack.c.b16 %v1258, %v1252
    %v1571 = vpack.c.b16 %v1259, %v1253
    %v1572 = vpack.c.b16 %v1266, %v1260
    %v1573 = vpack.c.b16 %v1267, %v1261
    %v1574 = vpack.c.b16 %v1268, %v1262
    %v1575 = vpack.c.b16 %v1269, %v1263
    %v1576 = vpack.c.b16 %v1270, %v1264
    %v1577 = vpack.c.b16 %v1271, %v1265
    %v1578 = vpack.c.b16 %v1278, %v1272
    %v1579 = vpack.c.b16 %v1279, %v1273
    %v1580 = vpack.c.b16 %v1280, %v1274
    %v1581 = vpack.c.b16 %v1281, %v1275
    %v1582 = vpack.c.b16 %v1282, %v1276
    %v1583 = vpack.c.b16 %v1283, %v1277
    %v1584 = vpack.c.b16 %v1290, %v1284
    %v1585 = vpack.c.b16 %v1291, %v1285
    %v1586 = vpack.c.b16 %v1292, %v1286
    %v1587 = vpack.c.b16 %v1293, %v1287
    %v1588 = vpack.c.b16 %v1294, %v1288
    %v1589 = vpack.c.b16 %v1295, %v1289
    %v1590 = vpack.c.b16 %v1302, %v1296
    %v1591 = vpack.c.b16 %v1303, %v1297
    %v1592 = vpack.c.b16 %v1304, %v1298
    %v1593 = vpack.c.b16 %v1305, %v1299
    %v1594 = vpack.c.b16 %v1306, %v1300
    %v1595 = vpack.c.b16 %v1307, %v1301
    %1884 = vmatprep.subr.bf16.mxu0 %v1309
    %1885 = vmatpush1.bf16.msra.mxu0 %v1308
    %1886 = vmatprep.subr.bf16.mxu0 %v1315
    %1887 = vmatpush1.bf16.msra.mxu0 %v1314
    %1888 = vmatprep.subr.bf16.mxu0 %v1321
    %1889 = vmatpush1.bf16.msra.mxu0 %v1320
    %1890 = vmatprep.subr.bf16.mxu0 %v1327
    %1891 = vmatpush1.bf16.msra.mxu0 %v1326
    %1892 = vmatprep.subr.bf16.mxu0 %v1333
    %1893 = vmatpush1.bf16.msra.mxu0 %v1332
    %1894 = vmatprep.subr.bf16.mxu0 %v1339
    %1895 = vmatpush1.bf16.msra.mxu0 %v1338
    %1896 = vmatprep.subr.bf16.mxu0 %v1345
    %1897 = vmatpush1.bf16.msra.mxu0 %v1344
    %1898 = vmatprep.subr.bf16.mxu0 %v1351
    %1899 = vmatpush1.bf16.msra.mxu0 %v1350
    %1900 = vmatprep.subr.bf16.mxu0 %v1357
    %1901 = vmatpush1.bf16.msra.mxu0 %v1356
    %1902 = vmatprep.subr.bf16.mxu0 %v1363
    %1903 = vmatpush1.bf16.msra.mxu0 %v1362
    %1904 = vmatprep.subr.bf16.mxu0 %v1369
    %1905 = vmatpush1.bf16.msra.mxu0 %v1368
    %1906 = vmatprep.subr.bf16.mxu0 %v1375
    %1907 = vmatpush1.bf16.msra.mxu0 %v1374
    %1908 = vmatprep.subr.bf16.mxu0 %v1381
    %1909 = vmatpush1.bf16.msra.mxu0 %v1380
    %1910 = vmatprep.subr.bf16.mxu0 %v1387
    %1911 = vmatpush1.bf16.msra.mxu0 %v1386
    %1912 = vmatprep.subr.bf16.mxu0 %v1393
    %1913 = vmatpush1.bf16.msra.mxu0 %v1392
    %1914 = vmatprep.subr.bf16.mxu0 %v1399
    %1915 = vmatpush1.bf16.msra.mxu0 %v1398
    %1916 = vmatprep.mubr.bf16.mxu0 %v119
    %1917 = vmatmul.mubr.bf16.gmra.mrb[0].mxu0 %v118
    %v1918 = vpop.f32.mrb[0].mxu0
    %v1919 = vadd.f32 %v417, %v1918
    %v1920 = vpop.f32.mrb[0].mxu0
    %v1921 = vadd.f32 %v421, %v1920
    %v1922 = vpop.f32.mrb[0].mxu0
    %v1923 = vadd.f32 %v417, %v1922
    %v1924 = vpop.f32.mrb[0].mxu0
    %v1925 = vadd.f32 %v421, %v1924
    %1926 = vdwg.mxu0
    %1927 = vmatprep.subr.bf16.mxu0 %v1405
    %1928 = vmatpush1.bf16.msra.mxu0 %v1404
    %1929 = vmatprep.subr.bf16.mxu0 %v1411
    %1930 = vmatpush1.bf16.msra.mxu0 %v1410
    %1931 = vmatprep.subr.bf16.mxu0 %v1417
    %1932 = vmatpush1.bf16.msra.mxu0 %v1416
    %1933 = vmatprep.subr.bf16.mxu0 %v1423
    %1934 = vmatpush1.bf16.msra.mxu0 %v1422
    %1935 = vmatprep.subr.bf16.mxu0 %v1429
    %1936 = vmatpush1.bf16.msra.mxu0 %v1428
    %1937 = vmatprep.subr.bf16.mxu0 %v1435
    %1938 = vmatpush1.bf16.msra.mxu0 %v1434
    %1939 = vmatprep.subr.bf16.mxu0 %v1441
    %1940 = vmatpush1.bf16.msra.mxu0 %v1440
    %1941 = vmatprep.subr.bf16.mxu0 %v1447
    %1942 = vmatpush1.bf16.msra.mxu0 %v1446
    %1943 = vmatprep.subr.bf16.mxu0 %v1453
    %1944 = vmatpush1.bf16.msra.mxu0 %v1452
    %1945 = vmatprep.subr.bf16.mxu0 %v1459
    %1946 = vmatpush1.bf16.msra.mxu0 %v1458
    %1947 = vmatprep.subr.bf16.mxu0 %v1465
    %1948 = vmatpush1.bf16.msra.mxu0 %v1464
    %1949 = vmatprep.subr.bf16.mxu0 %v1471
    %1950 = vmatpush1.bf16.msra.mxu0 %v1470
    %1951 = vmatprep.subr.bf16.mxu0 %v1477
    %1952 = vmatpush1.bf16.msra.mxu0 %v1476
    %1953 = vmatprep.subr.bf16.mxu0 %v1483
    %1954 = vmatpush1.bf16.msra.mxu0 %v1482
    %1955 = vmatprep.subr.bf16.mxu0 %v1489
    %1956 = vmatpush1.bf16.msra.mxu0 %v1488
    %1957 = vmatprep.subr.bf16.mxu0 %v1495
    %1958 = vmatpush1.bf16.msra.mxu0 %v1494
    %1959 = vmatprep.mubr.bf16.mxu0 %v121
    %1960 = vmatmul.mubr.bf16.gmra.mrb[0].mxu0 %v120
    %v1961 = vpop.f32.mrb[0].mxu0
    %v1962 = vadd.f32 %v1919, %v1961
    %v1963 = vpop.f32.mrb[0].mxu0
    %v1964 = vadd.f32 %v1921, %v1963
    %v1965 = vpop.f32.mrb[0].mxu0
    %v1966 = vadd.f32 %v1923, %v1965
    %v1967 = vpop.f32.mrb[0].mxu0
    %v1968 = vadd.f32 %v1925, %v1967
    %1969 = vdwg.mxu0
    %1970 = vmatprep.subr.bf16.mxu0 %v1501
    %1971 = vmatpush1.bf16.msra.mxu0 %v1500
    %1972 = vmatprep.subr.bf16.mxu0 %v1507
    %1973 = vmatpush1.bf16.msra.mxu0 %v1506
    %1974 = vmatprep.subr.bf16.mxu0 %v1513
    %1975 = vmatpush1.bf16.msra.mxu0 %v1512
    %1976 = vmatprep.subr.bf16.mxu0 %v1519
    %1977 = vmatpush1.bf16.msra.mxu0 %v1518
    %1978 = vmatprep.subr.bf16.mxu0 %v1525
    %1979 = vmatpush1.bf16.msra.mxu0 %v1524
    %1980 = vmatprep.subr.bf16.mxu0 %v1531
    %1981 = vmatpush1.bf16.msra.mxu0 %v1530
    %1982 = vmatprep.subr.bf16.mxu0 %v1537
    %1983 = vmatpush1.bf16.msra.mxu0 %v1536
    %1984 = vmatprep.subr.bf16.mxu0 %v1543
    %1985 = vmatpush1.bf16.msra.mxu0 %v1542
    %1986 = vmatprep.subr.bf16.mxu0 %v1549
    %1987 = vmatpush1.bf16.msra.mxu0 %v1548
    %1988 = vmatprep.subr.bf16.mxu0 %v1555
    %1989 = vmatpush1.bf16.msra.mxu0 %v1554
    %1990 = vmatprep.subr.bf16.mxu0 %v1561
    %1991 = vmatpush1.bf16.msra.mxu0 %v1560
    %1992 = vmatprep.subr.bf16.mxu0 %v1567
    %1993 = vmatpush1.bf16.msra.mxu0 %v1566
    %1994 = vmatprep.subr.bf16.mxu0 %v1573
    %1995 = vmatpush1.bf16.msra.mxu0 %v1572
    %1996 = vmatprep.subr.bf16.mxu0 %v1579
    %1997 = vmatpush1.bf16.msra.mxu0 %v1578
    %1998 = vmatprep.subr.bf16.mxu0 %v1585
    %1999 = vmatpush1.bf16.msra.mxu0 %v1584
    %2000 = vmatprep.subr.bf16.mxu0 %v1591
    %2001 = vmatpush1.bf16.msra.mxu0 %v1590
    %2002 = vmatprep.mubr.bf16.mxu0 %v123
    %2003 = vmatmul.mubr.bf16.gmra.mrb[0].mxu0 %v122
    %v2004 = vpop.f32.mrb[0].mxu0
    %v2005 = vadd.f32 %v1962, %v2004
    %v2006 = vpop.f32.mrb[0].mxu0
    %v2007 = vadd.f32 %v1964, %v2006
    %v2008 = vpop.f32.mrb[0].mxu0
    %v2009 = vadd.f32 %v1966, %v2008
    %v2010 = vpop.f32.mrb[0].mxu0
    %v2011 = vadd.f32 %v1968, %v2010
    %2012 = vdwg.mxu0
    %2013 = vmatprep.subr.bf16.mxu0 %v1311
    %2014 = vmatpush1.bf16.msra.mxu0 %v1310
    %2015 = vmatprep.subr.bf16.mxu0 %v1317
    %2016 = vmatpush1.bf16.msra.mxu0 %v1316
    %2017 = vmatprep.subr.bf16.mxu0 %v1323
    %2018 = vmatpush1.bf16.msra.mxu0 %v1322
    %2019 = vmatprep.subr.bf16.mxu0 %v1329
    %2020 = vmatpush1.bf16.msra.mxu0 %v1328
    %2021 = vmatprep.subr.bf16.mxu0 %v1335
    %2022 = vmatpush1.bf16.msra.mxu0 %v1334
    %2023 = vmatprep.subr.bf16.mxu0 %v1341
    %2024 = vmatpush1.bf16.msra.mxu0 %v1340
    %2025 = vmatprep.subr.bf16.mxu0 %v1347
    %2026 = vmatpush1.bf16.msra.mxu0 %v1346
    %2027 = vmatprep.subr.bf16.mxu0 %v1353
    %2028 = vmatpush1.bf16.msra.mxu0 %v1352
    %2029 = vmatprep.subr.bf16.mxu0 %v1359
    %2030 = vmatpush1.bf16.msra.mxu0 %v1358
    %2031 = vmatprep.subr.bf16.mxu0 %v1365
    %2032 = vmatpush1.bf16.msra.mxu0 %v1364
    %2033 = vmatprep.subr.bf16.mxu0 %v1371
    %2034 = vmatpush1.bf16.msra.mxu0 %v1370
    %2035 = vmatprep.subr.bf16.mxu0 %v1377
    %2036 = vmatpush1.bf16.msra.mxu0 %v1376
    %2037 = vmatprep.subr.bf16.mxu0 %v1383
    %2038 = vmatpush1.bf16.msra.mxu0 %v1382
    %2039 = vmatprep.subr.bf16.mxu0 %v1389
    %2040 = vmatpush1.bf16.msra.mxu0 %v1388
    %2041 = vmatprep.subr.bf16.mxu0 %v1395
    %2042 = vmatpush1.bf16.msra.mxu0 %v1394
    %2043 = vmatprep.subr.bf16.mxu0 %v1401
    %2044 = vmatpush1.bf16.msra.mxu0 %v1400
    %2045 = vmatprep.mubr.bf16.mxu0 %v119
    %2046 = vmatmul.mubr.bf16.gmra.mrb[0].mxu0 %v118
    %v2047 = vpop.f32.mrb[0].mxu0
    %v2048 = vadd.f32 %v425, %v2047
    %v2049 = vpop.f32.mrb[0].mxu0
    %v2050 = vadd.f32 %v429, %v2049
    %v2051 = vpop.f32.mrb[0].mxu0
    %v2052 = vadd.f32 %v425, %v2051
    %v2053 = vpop.f32.mrb[0].mxu0
    %v2054 = vadd.f32 %v429, %v2053
    %2055 = vdwg.mxu0
    %2056 = vmatprep.subr.bf16.mxu0 %v1407
    %2057 = vmatpush1.bf16.msra.mxu0 %v1406
    %2058 = vmatprep.subr.bf16.mxu0 %v1413
    %2059 = vmatpush1.bf16.msra.mxu0 %v1412
    %2060 = vmatprep.subr.bf16.mxu0 %v1419
    %2061 = vmatpush1.bf16.msra.mxu0 %v1418
    %2062 = vmatprep.subr.bf16.mxu0 %v1425
    %2063 = vmatpush1.bf16.msra.mxu0 %v1424
    %2064 = vmatprep.subr.bf16.mxu0 %v1431
    %2065 = vmatpush1.bf16.msra.mxu0 %v1430
    %2066 = vmatprep.subr.bf16.mxu0 %v1437
    %2067 = vmatpush1.bf16.msra.mxu0 %v1436
    %2068 = vmatprep.subr.bf16.mxu0 %v1443
    %2069 = vmatpush1.bf16.msra.mxu0 %v1442
    %2070 = vmatprep.subr.bf16.mxu0 %v1449
    %2071 = vmatpush1.bf16.msra.mxu0 %v1448
    %2072 = vmatprep.subr.bf16.mxu0 %v1455
    %2073 = vmatpush1.bf16.msra.mxu0 %v1454
    %2074 = vmatprep.subr.bf16.mxu0 %v1461
    %2075 = vmatpush1.bf16.msra.mxu0 %v1460
    %2076 = vmatprep.subr.bf16.mxu0 %v1467
    %2077 = vmatpush1.bf16.msra.mxu0 %v1466
    %2078 = vmatprep.subr.bf16.mxu0 %v1473
    %2079 = vmatpush1.bf16.msra.mxu0 %v1472
    %2080 = vmatprep.subr.bf16.mxu0 %v1479
    %2081 = vmatpush1.bf16.msra.mxu0 %v1478
    %2082 = vmatprep.subr.bf16.mxu0 %v1485
    %2083 = vmatpush1.bf16.msra.mxu0 %v1484
    %2084 = vmatprep.subr.bf16.mxu0 %v1491
    %2085 = vmatpush1.bf16.msra.mxu0 %v1490
    %2086 = vmatprep.subr.bf16.mxu0 %v1497
    %2087 = vmatpush1.bf16.msra.mxu0 %v1496
    %2088 = vmatprep.mubr.bf16.mxu0 %v121
    %2089 = vmatmul.mubr.bf16.gmra.mrb[0].mxu0 %v120
    %v2090 = vpop.f32.mrb[0].mxu0
    %v2091 = vadd.f32 %v2048, %v2090
    %v2092 = vpop.f32.mrb[0].mxu0
    %v2093 = vadd.f32 %v2050, %v2092
    %v2094 = vpop.f32.mrb[0].mxu0
    %v2095 = vadd.f32 %v2052, %v2094
    %v2096 = vpop.f32.mrb[0].mxu0
    %v2097 = vadd.f32 %v2054, %v2096
    %2098 = vdwg.mxu0
    %2099 = vmatprep.subr.bf16.mxu0 %v1503
    %2100 = vmatpush1.bf16.msra.mxu0 %v1502
    %2101 = vmatprep.subr.bf16.mxu0 %v1509
    %2102 = vmatpush1.bf16.msra.mxu0 %v1508
    %2103 = vmatprep.subr.bf16.mxu0 %v1515
    %2104 = vmatpush1.bf16.msra.mxu0 %v1514
    %2105 = vmatprep.subr.bf16.mxu0 %v1521
    %2106 = vmatpush1.bf16.msra.mxu0 %v1520
    %2107 = vmatprep.subr.bf16.mxu0 %v1527
    %2108 = vmatpush1.bf16.msra.mxu0 %v1526
    %2109 = vmatprep.subr.bf16.mxu0 %v1533
    %2110 = vmatpush1.bf16.msra.mxu0 %v1532
    %2111 = vmatprep.subr.bf16.mxu0 %v1539
    %2112 = vmatpush1.bf16.msra.mxu0 %v1538
    %2113 = vmatprep.subr.bf16.mxu0 %v1545
    %2114 = vmatpush1.bf16.msra.mxu0 %v1544
    %2115 = vmatprep.subr.bf16.mxu0 %v1551
    %2116 = vmatpush1.bf16.msra.mxu0 %v1550
    %2117 = vmatprep.subr.bf16.mxu0 %v1557
    %2118 = vmatpush1.bf16.msra.mxu0 %v1556
    %2119 = vmatprep.subr.bf16.mxu0 %v1563
    %2120 = vmatpush1.bf16.msra.mxu0 %v1562
    %2121 = vmatprep.subr.bf16.mxu0 %v1569
    %2122 = vmatpush1.bf16.msra.mxu0 %v1568
    %2123 = vmatprep.subr.bf16.mxu0 %v1575
    %2124 = vmatpush1.bf16.msra.mxu0 %v1574
    %2125 = vmatprep.subr.bf16.mxu0 %v1581
    %2126 = vmatpush1.bf16.msra.mxu0 %v1580
    %2127 = vmatprep.subr.bf16.mxu0 %v1587
    %2128 = vmatpush1.bf16.msra.mxu0 %v1586
    %2129 = vmatprep.subr.bf16.mxu0 %v1593
    %2130 = vmatpush1.bf16.msra.mxu0 %v1592
    %2131 = vmatprep.mubr.bf16.mxu0 %v123
    %2132 = vmatmul.mubr.bf16.gmra.mrb[0].mxu0 %v122
    %v2133 = vpop.f32.mrb[0].mxu0
    %v2134 = vadd.f32 %v2091, %v2133
    %v2135 = vpop.f32.mrb[0].mxu0
    %v2136 = vadd.f32 %v2093, %v2135
    %v2137 = vpop.f32.mrb[0].mxu0
    %v2138 = vadd.f32 %v2095, %v2137
    %v2139 = vpop.f32.mrb[0].mxu0
    %v2140 = vadd.f32 %v2097, %v2139
    %2141 = vdwg.mxu0
    %2142 = vmatprep.subr.bf16.mxu0 %v1313
    %2143 = vmatpush1.bf16.msra.mxu0 %v1312
    %2144 = vmatprep.subr.bf16.mxu0 %v1319
    %2145 = vmatpush1.bf16.msra.mxu0 %v1318
    %2146 = vmatprep.subr.bf16.mxu0 %v1325
    %2147 = vmatpush1.bf16.msra.mxu0 %v1324
    %2148 = vmatprep.subr.bf16.mxu0 %v1331
    %2149 = vmatpush1.bf16.msra.mxu0 %v1330
    %2150 = vmatprep.subr.bf16.mxu0 %v1337
    %2151 = vmatpush1.bf16.msra.mxu0 %v1336
    %2152 = vmatprep.subr.bf16.mxu0 %v1343
    %2153 = vmatpush1.bf16.msra.mxu0 %v1342
    %2154 = vmatprep.subr.bf16.mxu0 %v1349
    %2155 = vmatpush1.bf16.msra.mxu0 %v1348
    %2156 = vmatprep.subr.bf16.mxu0 %v1355
    %2157 = vmatpush1.bf16.msra.mxu0 %v1354
    %2158 = vmatprep.subr.bf16.mxu0 %v1361
    %2159 = vmatpush1.bf16.msra.mxu0 %v1360
    %2160 = vmatprep.subr.bf16.mxu0 %v1367
    %2161 = vmatpush1.bf16.msra.mxu0 %v1366
    %2162 = vmatprep.subr.bf16.mxu0 %v1373
    %2163 = vmatpush1.bf16.msra.mxu0 %v1372
    %2164 = vmatprep.subr.bf16.mxu0 %v1379
    %2165 = vmatpush1.bf16.msra.mxu0 %v1378
    %2166 = vmatprep.subr.bf16.mxu0 %v1385
    %2167 = vmatpush1.bf16.msra.mxu0 %v1384
    %2168 = vmatprep.subr.bf16.mxu0 %v1391
    %2169 = vmatpush1.bf16.msra.mxu0 %v1390
    %2170 = vmatprep.subr.bf16.mxu0 %v1397
    %2171 = vmatpush1.bf16.msra.mxu0 %v1396
    %2172 = vmatprep.subr.bf16.mxu0 %v1403
    %2173 = vmatpush1.bf16.msra.mxu0 %v1402
    %2174 = vmatprep.mubr.bf16.mxu0 %v119
    %2175 = vmatmul.mubr.bf16.gmra.mrb[0].mxu0 %v118
    %v2176 = vpop.f32.mrb[0].mxu0
    %v2177 = vadd.f32 %v433, %v2176
    %v2178 = vpop.f32.mrb[0].mxu0
    %v2179 = vadd.f32 %v437, %v2178
    %v2180 = vpop.f32.mrb[0].mxu0
    %v2181 = vadd.f32 %v433, %v2180
    %v2182 = vpop.f32.mrb[0].mxu0
    %v2183 = vadd.f32 %v437, %v2182
    %2184 = vdwg.mxu0
    %2185 = vmatprep.subr.bf16.mxu0 %v1409
    %2186 = vmatpush1.bf16.msra.mxu0 %v1408
    %2187 = vmatprep.subr.bf16.mxu0 %v1415
    %2188 = vmatpush1.bf16.msra.mxu0 %v1414
    %2189 = vmatprep.subr.bf16.mxu0 %v1421
    %2190 = vmatpush1.bf16.msra.mxu0 %v1420
    %2191 = vmatprep.subr.bf16.mxu0 %v1427
    %2192 = vmatpush1.bf16.msra.mxu0 %v1426
    %2193 = vmatprep.subr.bf16.mxu0 %v1433
    %2194 = vmatpush1.bf16.msra.mxu0 %v1432
    %2195 = vmatprep.subr.bf16.mxu0 %v1439
    %2196 = vmatpush1.bf16.msra.mxu0 %v1438
    %2197 = vmatprep.subr.bf16.mxu0 %v1445
    %2198 = vmatpush1.bf16.msra.mxu0 %v1444
    %2199 = vmatprep.subr.bf16.mxu0 %v1451
    %2200 = vmatpush1.bf16.msra.mxu0 %v1450
    %2201 = vmatprep.subr.bf16.mxu0 %v1457
    %2202 = vmatpush1.bf16.msra.mxu0 %v1456
    %2203 = vmatprep.subr.bf16.mxu0 %v1463
    %2204 = vmatpush1.bf16.msra.mxu0 %v1462
    %2205 = vmatprep.subr.bf16.mxu0 %v1469
    %2206 = vmatpush1.bf16.msra.mxu0 %v1468
    %2207 = vmatprep.subr.bf16.mxu0 %v1475
    %2208 = vmatpush1.bf16.msra.mxu0 %v1474
    %2209 = vmatprep.subr.bf16.mxu0 %v1481
    %2210 = vmatpush1.bf16.msra.mxu0 %v1480
    %2211 = vmatprep.subr.bf16.mxu0 %v1487
    %2212 = vmatpush1.bf16.msra.mxu0 %v1486
    %2213 = vmatprep.subr.bf16.mxu0 %v1493
    %2214 = vmatpush1.bf16.msra.mxu0 %v1492
    %2215 = vmatprep.subr.bf16.mxu0 %v1499
    %2216 = vmatpush1.bf16.msra.mxu0 %v1498
    %2217 = vmatprep.mubr.bf16.mxu0 %v121
    %2218 = vmatmul.mubr.bf16.gmra.mrb[0].mxu0 %v120
    %v2219 = vpop.f32.mrb[0].mxu0
    %v2220 = vadd.f32 %v2177, %v2219
    %v2221 = vpop.f32.mrb[0].mxu0
    %v2222 = vadd.f32 %v2179, %v2221
    %v2223 = vpop.f32.mrb[0].mxu0
    %v2224 = vadd.f32 %v2181, %v2223
    %v2225 = vpop.f32.mrb[0].mxu0
    %v2226 = vadd.f32 %v2183, %v2225
    %2227 = vdwg.mxu0
    %2228 = vmatprep.subr.bf16.mxu0 %v1505
    %2229 = vmatpush1.bf16.msra.mxu0 %v1504
    %2230 = vmatprep.subr.bf16.mxu0 %v1511
    %2231 = vmatpush1.bf16.msra.mxu0 %v1510
    %2232 = vmatprep.subr.bf16.mxu0 %v1517
    %2233 = vmatpush1.bf16.msra.mxu0 %v1516
    %2234 = vmatprep.subr.bf16.mxu0 %v1523
    %2235 = vmatpush1.bf16.msra.mxu0 %v1522
    %2236 = vmatprep.subr.bf16.mxu0 %v1529
    %2237 = vmatpush1.bf16.msra.mxu0 %v1528
    %2238 = vmatprep.subr.bf16.mxu0 %v1535
    %2239 = vmatpush1.bf16.msra.mxu0 %v1534
    %2240 = vmatprep.subr.bf16.mxu0 %v1541
    %2241 = vmatpush1.bf16.msra.mxu0 %v1540
    %2242 = vmatprep.subr.bf16.mxu0 %v1547
    %2243 = vmatpush1.bf16.msra.mxu0 %v1546
    %2244 = vmatprep.subr.bf16.mxu0 %v1553
    %2245 = vmatpush1.bf16.msra.mxu0 %v1552
    %2246 = vmatprep.subr.bf16.mxu0 %v1559
    %2247 = vmatpush1.bf16.msra.mxu0 %v1558
    %2248 = vmatprep.subr.bf16.mxu0 %v1565
    %2249 = vmatpush1.bf16.msra.mxu0 %v1564
    %2250 = vmatprep.subr.bf16.mxu0 %v1571
    %2251 = vmatpush1.bf16.msra.mxu0 %v1570
    %2252 = vmatprep.subr.bf16.mxu0 %v1577
    %2253 = vmatpush1.bf16.msra.mxu0 %v1576
    %2254 = vmatprep.subr.bf16.mxu0 %v1583
    %2255 = vmatpush1.bf16.msra.mxu0 %v1582
    %2256 = vmatprep.subr.bf16.mxu0 %v1589
    %2257 = vmatpush1.bf16.msra.mxu0 %v1588
    %2258 = vmatprep.subr.bf16.mxu0 %v1595
    %2259 = vmatpush1.bf16.msra.mxu0 %v1594
    %2260 = vmatprep.mubr.bf16.mxu0 %v123
    %2261 = vmatmul.mubr.bf16.gmra.mrb[0].mxu0 %v122
    %v2262 = vpop.f32.mrb[0].mxu0
    %v2263 = vadd.f32 %v2220, %v2262
    %v2264 = vpop.f32.mrb[0].mxu0
    %v2265 = vadd.f32 %v2222, %v2264
    %v2266 = vpop.f32.mrb[0].mxu0
    %v2267 = vadd.f32 %v2224, %v2266
    %v2268 = vpop.f32.mrb[0].mxu0
    %v2269 = vadd.f32 %v2226, %v2268
    %2270 = vdwg.mxu0
    %vm2271 = vcmp.gt.f32.partialorder %v2005, 0.0
    %vm2272 = vcmp.gt.f32.partialorder %v2007, 0.0
    %vm2273 = vcmp.gt.f32.partialorder %v2134, 0.0
    %vm2274 = vcmp.gt.f32.partialorder %v2136, 0.0
    %vm2275 = vcmp.gt.f32.partialorder %v2263, 0.0
    %vm2276 = vcmp.gt.f32.partialorder %v2265, 0.0
    %vm2277 = vcmp.gt.f32.partialorder %v2009, 0.0
    %vm2278 = vcmp.gt.f32.partialorder %v2011, 0.0
    %vm2279 = vcmp.gt.f32.partialorder %v2138, 0.0
    %vm2280 = vcmp.gt.f32.partialorder %v2140, 0.0
    %vm2281 = vcmp.gt.f32.partialorder %v2267, 0.0
    %vm2282 = vcmp.gt.f32.partialorder %v2269, 0.0
    %v2283 = vmul.f32 %v2005, 0.2
    %v2284 = vmul.f32 %v2007, 0.2
    %v2285 = vmul.f32 %v2134, 0.2
    %v2286 = vmul.f32 %v2136, 0.2
    %v2287 = vmul.f32 %v2263, 0.2
    %v2288 = vmul.f32 %v2265, 0.2
    %v2289 = vmul.f32 %v2009, 0.2
    %v2290 = vmul.f32 %v2011, 0.2
    %v2291 = vmul.f32 %v2138, 0.2
    %v2292 = vmul.f32 %v2140, 0.2
    %v2293 = vmul.f32 %v2267, 0.2
    %v2294 = vmul.f32 %v2269, 0.2
    %v2295 = vsel %vm2271, %v2005, %v2283
    %v2296 = vsel %vm2272, %v2007, %v2284
    %v2297 = vsel %vm2273, %v2134, %v2285
    %v2298 = vsel %vm2274, %v2136, %v2286
    %v2299 = vsel %vm2275, %v2263, %v2287
    %v2300 = vsel %vm2276, %v2265, %v2288
    %v2301 = vsel %vm2277, %v2009, %v2289
    %v2302 = vsel %vm2278, %v2011, %v2290
    %v2303 = vsel %vm2279, %v2138, %v2291
    %v2304 = vsel %vm2280, %v2140, %v2292
    %v2305 = vsel %vm2281, %v2267, %v2293
    %v2306 = vsel %vm2282, %v2269, %v2294
    %v2307 = vpack.c.bf16 %v2301, %v2295
    %v2308 = vpack.c.bf16 %v2302, %v2296
    %v2309 = vpack.c.bf16 %v2303, %v2297
    %v2310 = vpack.c.bf16 %v2304, %v2298
    %v2311 = vpack.c.bf16 %v2305, %v2299
    %v2312 = vpack.c.bf16 %v2306, %v2300
    %v2313 = vld [vmem:[#allocation8] sm:$0xf]
    %v2314 = vld [vmem:[#allocation8 + $0x4] sm:$0xf]
    %v2315 = vld [vmem:[#allocation8 + $0x8] sm:$0xf]
    %v2316 = vld [vmem:[#allocation8 + $0xc] sm:$0xf]
    %v2317 = vld [vmem:[#allocation8 + $0x10] sm:$0xf]
    %v2318 = vld [vmem:[#allocation8 + $0x14] sm:$0xf]
    %v2319 = vld [vmem:[#allocation8 + $0x18] sm:$0xf]
    %v2320 = vld [vmem:[#allocation8 + $0x1c] sm:$0xf]
    %v2321 = vld [vmem:[#allocation8 + $0x20] sm:$0xf]
    %v2322 = vld [vmem:[#allocation8 + $0x24] sm:$0xf]
    %v2323 = vld [vmem:[#allocation8 + $0x28] sm:$0xf]
    %v2324 = vld [vmem:[#allocation8 + $0x2c] sm:$0xf]
    %v2325 = vld [vmem:[#allocation8 + $0x30] sm:$0xf]
    %v2326 = vld [vmem:[#allocation8 + $0x34] sm:$0xf]
    %v2327 = vld [vmem:[#allocation8 + $0x38] sm:$0xf]
    %v2328 = vld [vmem:[#allocation8 + $0x3c] sm:$0xf]
    %v2329 = vld [vmem:[#allocation8 + $0x40] sm:$0xf]
    %v2330 = vld [vmem:[#allocation8 + $0x44] sm:$0xf]
    %v2331 = vld [vmem:[#allocation8 + $0x48] sm:$0xf]
    %v2332 = vld [vmem:[#allocation8 + $0x4c] sm:$0xf]
    %v2333 = vld [vmem:[#allocation8 + $0x50] sm:$0xf]
    %v2334 = vld [vmem:[#allocation8 + $0x54] sm:$0xf]
    %v2335 = vld [vmem:[#allocation8 + $0x58] sm:$0xf]
    %v2336 = vld [vmem:[#allocation8 + $0x5c] sm:$0xf]
    %v2337 = vld [vmem:[#allocation8 + $0x60] sm:$0xf]
    %v2338 = vld [vmem:[#allocation8 + $0x64] sm:$0xf]
    %v2339 = vld [vmem:[#allocation8 + $0x68] sm:$0xf]
    %v2340 = vld [vmem:[#allocation8 + $0x6c] sm:$0xf]
    %v2341 = vld [vmem:[#allocation8 + $0x70] sm:$0xf]
    %v2342 = vld [vmem:[#allocation8 + $0x74] sm:$0xf]
    %v2343 = vld [vmem:[#allocation8 + $0x78] sm:$0xf]
    %v2344 = vld [vmem:[#allocation8 + $0x7c] sm:$0xf]
    %v2345 = vld [vmem:[#allocation8 + $0x80] sm:$0xf]
    %v2346 = vld [vmem:[#allocation8 + $0x84] sm:$0xf]
    %v2347 = vld [vmem:[#allocation8 + $0x88] sm:$0xf]
    %v2348 = vld [vmem:[#allocation8 + $0x8c] sm:$0xf]
    %v2349 = vld [vmem:[#allocation8 + $0x90] sm:$0xf]
    %v2350 = vld [vmem:[#allocation8 + $0x94] sm:$0xf]
    %v2351 = vld [vmem:[#allocation8 + $0x98] sm:$0xf]
    %v2352 = vld [vmem:[#allocation8 + $0x9c] sm:$0xf]
    %v2353 = vld [vmem:[#allocation8 + $0xa0] sm:$0xf]
    %v2354 = vld [vmem:[#allocation8 + $0xa4] sm:$0xf]
    %v2355 = vld [vmem:[#allocation8 + $0xa8] sm:$0xf]
    %v2356 = vld [vmem:[#allocation8 + $0xac] sm:$0xf]
    %v2357 = vld [vmem:[#allocation8 + $0xb0] sm:$0xf]
    %v2358 = vld [vmem:[#allocation8 + $0xb4] sm:$0xf]
    %v2359 = vld [vmem:[#allocation8 + $0xb8] sm:$0xf]
    %v2360 = vld [vmem:[#allocation8 + $0xbc] sm:$0xf]
    %v2361 = vld [vmem:[#allocation8 + $0xc0] sm:$0xf]
    %v2362 = vld [vmem:[#allocation8 + $0xc4] sm:$0xf]
    %v2363 = vld [vmem:[#allocation8 + $0xc8] sm:$0xf]
    %v2364 = vld [vmem:[#allocation8 + $0xcc] sm:$0xf]
    %v2365 = vld [vmem:[#allocation8 + $0xd0] sm:$0xf]
    %v2366 = vld [vmem:[#allocation8 + $0xd4] sm:$0xf]
    %v2367 = vld [vmem:[#allocation8 + $0xd8] sm:$0xf]
    %v2368 = vld [vmem:[#allocation8 + $0xdc] sm:$0xf]
    %v2369 = vld [vmem:[#allocation8 + $0xe0] sm:$0xf]
    %v2370 = vld [vmem:[#allocation8 + $0xe4] sm:$0xf]
    %v2371 = vld [vmem:[#allocation8 + $0xe8] sm:$0xf]
    %v2372 = vld [vmem:[#allocation8 + $0xec] sm:$0xf]
    %v2373 = vld [vmem:[#allocation8 + $0xf0] sm:$0xf]
    %v2374 = vld [vmem:[#allocation8 + $0xf4] sm:$0xf]
    %v2375 = vld [vmem:[#allocation8 + $0xf8] sm:$0xf]
    %v2376 = vld [vmem:[#allocation8 + $0xfc] sm:$0xf]
    %v2377 = vld [vmem:[#allocation8 + $0x100] sm:$0xf]
    %v2378 = vld [vmem:[#allocation8 + $0x104] sm:$0xf]
    %v2379 = vld [vmem:[#allocation8 + $0x108] sm:$0xf]
    %v2380 = vld [vmem:[#allocation8 + $0x10c] sm:$0xf]
    %v2381 = vld [vmem:[#allocation8 + $0x110] sm:$0xf]
    %v2382 = vld [vmem:[#allocation8 + $0x114] sm:$0xf]
    %v2383 = vld [vmem:[#allocation8 + $0x118] sm:$0xf]
    %v2384 = vld [vmem:[#allocation8 + $0x11c] sm:$0xf]
    %v2385 = vld [vmem:[#allocation8 + $0x120] sm:$0xf]
    %v2386 = vld [vmem:[#allocation8 + $0x124] sm:$0xf]
    %v2387 = vld [vmem:[#allocation8 + $0x128] sm:$0xf]
    %v2388 = vld [vmem:[#allocation8 + $0x12c] sm:$0xf]
    %v2389 = vld [vmem:[#allocation8 + $0x130] sm:$0xf]
    %v2390 = vld [vmem:[#allocation8 + $0x134] sm:$0xf]
    %v2391 = vld [vmem:[#allocation8 + $0x138] sm:$0xf]
    %v2392 = vld [vmem:[#allocation8 + $0x13c] sm:$0xf]
    %v2393 = vld [vmem:[#allocation8 + $0x140] sm:$0xf]
    %v2394 = vld [vmem:[#allocation8 + $0x144] sm:$0xf]
    %v2395 = vld [vmem:[#allocation8 + $0x148] sm:$0xf]
    %v2396 = vld [vmem:[#allocation8 + $0x14c] sm:$0xf]
    %v2397 = vld [vmem:[#allocation8 + $0x150] sm:$0xf]
    %v2398 = vld [vmem:[#allocation8 + $0x154] sm:$0xf]
    %v2399 = vld [vmem:[#allocation8 + $0x158] sm:$0xf]
    %v2400 = vld [vmem:[#allocation8 + $0x15c] sm:$0xf]
    %v2401 = vld [vmem:[#allocation8 + $0x160] sm:$0xf]
    %v2402 = vld [vmem:[#allocation8 + $0x164] sm:$0xf]
    %v2403 = vld [vmem:[#allocation8 + $0x168] sm:$0xf]
    %v2404 = vld [vmem:[#allocation8 + $0x16c] sm:$0xf]
    %v2405 = vld [vmem:[#allocation8 + $0x170] sm:$0xf]
    %v2406 = vld [vmem:[#allocation8 + $0x174] sm:$0xf]
    %v2407 = vld [vmem:[#allocation8 + $0x178] sm:$0xf]
    %v2408 = vld [vmem:[#allocation8 + $0x17c] sm:$0xf]
    %v2409 = vld [vmem:[#allocation10] sm:$0x1]
    %v2411 = vlaneseq
    %v2412 = vshrl.u32 %v2411, 7
    %v2413 = vsub.s32 0, %v2412
    %v2414 = vrot.slane %v2409, %v2413
    %v2512 = vunpack.c.l.b16 %v2313
    %v2513 = vunpack.c.l.b16 %v2314
    %v2514 = vunpack.c.l.b16 %v2315
    %v2515 = vunpack.c.l.b16 %v2316
    %v2516 = vunpack.c.l.b16 %v2317
    %v2517 = vunpack.c.l.b16 %v2318
    %v2518 = vunpack.c.l.b16 %v2319
    %v2519 = vunpack.c.l.b16 %v2320
    %v2520 = vunpack.c.l.b16 %v2321
    %v2521 = vunpack.c.l.b16 %v2322
    %v2522 = vunpack.c.l.b16 %v2323
    %v2523 = vunpack.c.l.b16 %v2324
    %v2524 = vunpack.c.l.b16 %v2325
    %v2525 = vunpack.c.l.b16 %v2326
    %v2526 = vunpack.c.l.b16 %v2327
    %v2527 = vunpack.c.l.b16 %v2328
    %v2528 = vunpack.c.l.b16 %v2329
    %v2529 = vunpack.c.l.b16 %v2330
    %v2530 = vunpack.c.l.b16 %v2331
    %v2531 = vunpack.c.l.b16 %v2332
    %v2532 = vunpack.c.l.b16 %v2333
    %v2533 = vunpack.c.l.b16 %v2334
    %v2534 = vunpack.c.l.b16 %v2335
    %v2535 = vunpack.c.l.b16 %v2336
    %v2536 = vunpack.c.l.b16 %v2337
    %v2537 = vunpack.c.l.b16 %v2338
    %v2538 = vunpack.c.l.b16 %v2339
    %v2539 = vunpack.c.l.b16 %v2340
    %v2540 = vunpack.c.l.b16 %v2341
    %v2541 = vunpack.c.l.b16 %v2342
    %v2542 = vunpack.c.l.b16 %v2343
    %v2543 = vunpack.c.l.b16 %v2344
    %v2544 = vunpack.c.l.b16 %v2345
    %v2545 = vunpack.c.l.b16 %v2346
    %v2546 = vunpack.c.l.b16 %v2347
    %v2547 = vunpack.c.l.b16 %v2348
    %v2548 = vunpack.c.l.b16 %v2349
    %v2549 = vunpack.c.l.b16 %v2350
    %v2550 = vunpack.c.l.b16 %v2351
    %v2551 = vunpack.c.l.b16 %v2352
    %v2552 = vunpack.c.l.b16 %v2353
    %v2553 = vunpack.c.l.b16 %v2354
    %v2554 = vunpack.c.l.b16 %v2355
    %v2555 = vunpack.c.l.b16 %v2356
    %v2556 = vunpack.c.l.b16 %v2357
    %v2557 = vunpack.c.l.b16 %v2358
    %v2558 = vunpack.c.l.b16 %v2359
    %v2559 = vunpack.c.l.b16 %v2360
    %v2560 = vunpack.c.l.b16 %v2361
    %v2561 = vunpack.c.l.b16 %v2362
    %v2562 = vunpack.c.l.b16 %v2363
    %v2563 = vunpack.c.l.b16 %v2364
    %v2564 = vunpack.c.l.b16 %v2365
    %v2565 = vunpack.c.l.b16 %v2366
    %v2566 = vunpack.c.l.b16 %v2367
    %v2567 = vunpack.c.l.b16 %v2368
    %v2568 = vunpack.c.l.b16 %v2369
    %v2569 = vunpack.c.l.b16 %v2370
    %v2570 = vunpack.c.l.b16 %v2371
    %v2571 = vunpack.c.l.b16 %v2372
    %v2572 = vunpack.c.l.b16 %v2373
    %v2573 = vunpack.c.l.b16 %v2374
    %v2574 = vunpack.c.l.b16 %v2375
    %v2575 = vunpack.c.l.b16 %v2376
    %v2576 = vunpack.c.l.b16 %v2377
    %v2577 = vunpack.c.l.b16 %v2378
    %v2578 = vunpack.c.l.b16 %v2379
    %v2579 = vunpack.c.l.b16 %v2380
    %v2580 = vunpack.c.l.b16 %v2381
    %v2581 = vunpack.c.l.b16 %v2382
    %v2582 = vunpack.c.l.b16 %v2383
    %v2583 = vunpack.c.l.b16 %v2384
    %v2584 = vunpack.c.l.b16 %v2385
    %v2585 = vunpack.c.l.b16 %v2386
    %v2586 = vunpack.c.l.b16 %v2387
    %v2587 = vunpack.c.l.b16 %v2388
    %v2588 = vunpack.c.l.b16 %v2389
    %v2589 = vunpack.c.l.b16 %v2390
    %v2590 = vunpack.c.l.b16 %v2391
    %v2591 = vunpack.c.l.b16 %v2392
    %v2592 = vunpack.c.l.b16 %v2393
    %v2593 = vunpack.c.l.b16 %v2394
    %v2594 = vunpack.c.l.b16 %v2395
    %v2595 = vunpack.c.l.b16 %v2396
    %v2596 = vunpack.c.l.b16 %v2397
    %v2597 = vunpack.c.l.b16 %v2398
    %v2598 = vunpack.c.l.b16 %v2399
    %v2599 = vunpack.c.l.b16 %v2400
    %v2600 = vunpack.c.l.b16 %v2401
    %v2601 = vunpack.c.l.b16 %v2402
    %v2602 = vunpack.c.l.b16 %v2403
    %v2603 = vunpack.c.l.b16 %v2404
    %v2604 = vunpack.c.l.b16 %v2405
    %v2605 = vunpack.c.l.b16 %v2406
    %v2606 = vunpack.c.l.b16 %v2407
    %v2607 = vunpack.c.l.b16 %v2408
    %v2608 = vpack.c.b16 %v2513, %v2512
    %v2609 = vpack.c.b16 %v2515, %v2514
    %v2610 = vpack.c.b16 %v2517, %v2516
    %v2611 = vpack.c.b16 %v2519, %v2518
    %v2612 = vpack.c.b16 %v2521, %v2520
    %v2613 = vpack.c.b16 %v2523, %v2522
    %v2614 = vpack.c.b16 %v2525, %v2524
    %v2615 = vpack.c.b16 %v2527, %v2526
    %v2616 = vpack.c.b16 %v2529, %v2528
    %v2617 = vpack.c.b16 %v2531, %v2530
    %v2618 = vpack.c.b16 %v2533, %v2532
    %v2619 = vpack.c.b16 %v2535, %v2534
    %v2620 = vpack.c.b16 %v2537, %v2536
    %v2621 = vpack.c.b16 %v2539, %v2538
    %v2622 = vpack.c.b16 %v2541, %v2540
    %v2623 = vpack.c.b16 %v2543, %v2542
    %v2624 = vpack.c.b16 %v2545, %v2544
    %v2625 = vpack.c.b16 %v2547, %v2546
    %v2626 = vpack.c.b16 %v2549, %v2548
    %v2627 = vpack.c.b16 %v2551, %v2550
    %v2628 = vpack.c.b16 %v2553, %v2552
    %v2629 = vpack.c.b16 %v2555, %v2554
    %v2630 = vpack.c.b16 %v2557, %v2556
    %v2631 = vpack.c.b16 %v2559, %v2558
    %v2632 = vpack.c.b16 %v2561, %v2560
    %v2633 = vpack.c.b16 %v2563, %v2562
    %v2634 = vpack.c.b16 %v2565, %v2564
    %v2635 = vpack.c.b16 %v2567, %v2566
    %v2636 = vpack.c.b16 %v2569, %v2568
    %v2637 = vpack.c.b16 %v2571, %v2570
    %v2638 = vpack.c.b16 %v2573, %v2572
    %v2639 = vpack.c.b16 %v2575, %v2574
    %v2640 = vpack.c.b16 %v2577, %v2576
    %v2641 = vpack.c.b16 %v2579, %v2578
    %v2642 = vpack.c.b16 %v2581, %v2580
    %v2643 = vpack.c.b16 %v2583, %v2582
    %v2644 = vpack.c.b16 %v2585, %v2584
    %v2645 = vpack.c.b16 %v2587, %v2586
    %v2646 = vpack.c.b16 %v2589, %v2588
    %v2647 = vpack.c.b16 %v2591, %v2590
    %v2648 = vpack.c.b16 %v2593, %v2592
    %v2649 = vpack.c.b16 %v2595, %v2594
    %v2650 = vpack.c.b16 %v2597, %v2596
    %v2651 = vpack.c.b16 %v2599, %v2598
    %v2652 = vpack.c.b16 %v2601, %v2600
    %v2653 = vpack.c.b16 %v2603, %v2602
    %v2654 = vpack.c.b16 %v2605, %v2604
    %v2655 = vpack.c.b16 %v2607, %v2606
    %2704 = vmatprep.subr.bf16.mxu0 0
    %2705 = vmatpush1.bf16.msra.mxu0 %v2608
    %2706 = vmatprep.subr.bf16.mxu0 0
    %2707 = vmatpush1.bf16.msra.mxu0 %v2609
    %2708 = vmatprep.subr.bf16.mxu0 0
    %2709 = vmatpush1.bf16.msra.mxu0 %v2610
    %2710 = vmatprep.subr.bf16.mxu0 0
    %2711 = vmatpush1.bf16.msra.mxu0 %v2611
    %2712 = vmatprep.subr.bf16.mxu0 0
    %2713 = vmatpush1.bf16.msra.mxu0 %v2612
    %2714 = vmatprep.subr.bf16.mxu0 0
    %2715 = vmatpush1.bf16.msra.mxu0 %v2613
    %2716 = vmatprep.subr.bf16.mxu0 0
    %2717 = vmatpush1.bf16.msra.mxu0 %v2614
    %2718 = vmatprep.subr.bf16.mxu0 0
    %2719 = vmatpush1.bf16.msra.mxu0 %v2615
    %2720 = vmatprep.subr.bf16.mxu0 0
    %2721 = vmatpush1.bf16.msra.mxu0 %v2616
    %2722 = vmatprep.subr.bf16.mxu0 0
    %2723 = vmatpush1.bf16.msra.mxu0 %v2617
    %2724 = vmatprep.subr.bf16.mxu0 0
    %2725 = vmatpush1.bf16.msra.mxu0 %v2618
    %2726 = vmatprep.subr.bf16.mxu0 0
    %2727 = vmatpush1.bf16.msra.mxu0 %v2619
    %2728 = vmatprep.subr.bf16.mxu0 0
    %2729 = vmatpush1.bf16.msra.mxu0 %v2620
    %2730 = vmatprep.subr.bf16.mxu0 0
    %2731 = vmatpush1.bf16.msra.mxu0 %v2621
    %2732 = vmatprep.subr.bf16.mxu0 0
    %2733 = vmatpush1.bf16.msra.mxu0 %v2622
    %2734 = vmatprep.subr.bf16.mxu0 0
    %2735 = vmatpush1.bf16.msra.mxu0 %v2623
    %2736 = vmatprep.mubr.bf16.mxu0 %v2308
    %2737 = vmatmul.mubr.bf16.gmra.mrb[0].mxu0 %v2307
    %v2738 = vpop.f32.mrb[0].mxu0
    %v2739 = vadd.f32 %v2414, %v2738
    %v2740 = vpop.f32.mrb[0].mxu0
    %v2741 = vpop.f32.mrb[0].mxu0
    %v2742 = vadd.f32 %v2414, %v2741
    %v2743 = vpop.f32.mrb[0].mxu0
    %2744 = vdwg.mxu0
    %2745 = vmatprep.subr.bf16.mxu0 0
    %2746 = vmatpush1.bf16.msra.mxu0 %v2624
    %2747 = vmatprep.subr.bf16.mxu0 0
    %2748 = vmatpush1.bf16.msra.mxu0 %v2625
    %2749 = vmatprep.subr.bf16.mxu0 0
    %2750 = vmatpush1.bf16.msra.mxu0 %v2626
    %2751 = vmatprep.subr.bf16.mxu0 0
    %2752 = vmatpush1.bf16.msra.mxu0 %v2627
    %2753 = vmatprep.subr.bf16.mxu0 0
    %2754 = vmatpush1.bf16.msra.mxu0 %v2628
    %2755 = vmatprep.subr.bf16.mxu0 0
    %2756 = vmatpush1.bf16.msra.mxu0 %v2629
    %2757 = vmatprep.subr.bf16.mxu0 0
    %2758 = vmatpush1.bf16.msra.mxu0 %v2630
    %2759 = vmatprep.subr.bf16.mxu0 0
    %2760 = vmatpush1.bf16.msra.mxu0 %v2631
    %2761 = vmatprep.subr.bf16.mxu0 0
    %2762 = vmatpush1.bf16.msra.mxu0 %v2632
    %2763 = vmatprep.subr.bf16.mxu0 0
    %2764 = vmatpush1.bf16.msra.mxu0 %v2633
    %2765 = vmatprep.subr.bf16.mxu0 0
    %2766 = vmatpush1.bf16.msra.mxu0 %v2634
    %2767 = vmatprep.subr.bf16.mxu0 0
    %2768 = vmatpush1.bf16.msra.mxu0 %v2635
    %2769 = vmatprep.subr.bf16.mxu0 0
    %2770 = vmatpush1.bf16.msra.mxu0 %v2636
    %2771 = vmatprep.subr.bf16.mxu0 0
    %2772 = vmatpush1.bf16.msra.mxu0 %v2637
    %2773 = vmatprep.subr.bf16.mxu0 0
    %2774 = vmatpush1.bf16.msra.mxu0 %v2638
    %2775 = vmatprep.subr.bf16.mxu0 0
    %2776 = vmatpush1.bf16.msra.mxu0 %v2639
    %2777 = vmatprep.mubr.bf16.mxu0 %v2310
    %2778 = vmatmul.mubr.bf16.gmra.mrb[0].mxu0 %v2309
    %v2779 = vpop.f32.mrb[0].mxu0
    %v2780 = vadd.f32 %v2739, %v2779
    %v2781 = vpop.f32.mrb[0].mxu0
    %v2782 = vpop.f32.mrb[0].mxu0
    %v2783 = vadd.f32 %v2742, %v2782
    %v2784 = vpop.f32.mrb[0].mxu0
    %2785 = vdwg.mxu0
    %2786 = vmatprep.subr.bf16.mxu0 0
    %2787 = vmatpush1.bf16.msra.mxu0 %v2640
    %2788 = vmatprep.subr.bf16.mxu0 0
    %2789 = vmatpush1.bf16.msra.mxu0 %v2641
    %2790 = vmatprep.subr.bf16.mxu0 0
    %2791 = vmatpush1.bf16.msra.mxu0 %v2642
    %2792 = vmatprep.subr.bf16.mxu0 0
    %2793 = vmatpush1.bf16.msra.mxu0 %v2643
    %2794 = vmatprep.subr.bf16.mxu0 0
    %2795 = vmatpush1.bf16.msra.mxu0 %v2644
    %2796 = vmatprep.subr.bf16.mxu0 0
    %2797 = vmatpush1.bf16.msra.mxu0 %v2645
    %2798 = vmatprep.subr.bf16.mxu0 0
    %2799 = vmatpush1.bf16.msra.mxu0 %v2646
    %2800 = vmatprep.subr.bf16.mxu0 0
    %2801 = vmatpush1.bf16.msra.mxu0 %v2647
    %2802 = vmatprep.subr.bf16.mxu0 0
    %2803 = vmatpush1.bf16.msra.mxu0 %v2648
    %2804 = vmatprep.subr.bf16.mxu0 0
    %2805 = vmatpush1.bf16.msra.mxu0 %v2649
    %2806 = vmatprep.subr.bf16.mxu0 0
    %2807 = vmatpush1.bf16.msra.mxu0 %v2650
    %2808 = vmatprep.subr.bf16.mxu0 0
    %2809 = vmatpush1.bf16.msra.mxu0 %v2651
    %2810 = vmatprep.subr.bf16.mxu0 0
    %2811 = vmatpush1.bf16.msra.mxu0 %v2652
    %2812 = vmatprep.subr.bf16.mxu0 0
    %2813 = vmatpush1.bf16.msra.mxu0 %v2653
    %2814 = vmatprep.subr.bf16.mxu0 0
    %2815 = vmatpush1.bf16.msra.mxu0 %v2654
    %2816 = vmatprep.subr.bf16.mxu0 0
    %2817 = vmatpush1.bf16.msra.mxu0 %v2655
    %2818 = vmatprep.mubr.bf16.mxu0 %v2312
    %2819 = vmatmul.mubr.bf16.gmra.mrb[0].mxu0 %v2311
    %v2820 = vpop.f32.mrb[0].mxu0
    %v2821 = vadd.f32 %v2780, %v2820
    %v2822 = vpop.f32.mrb[0].mxu0
    %v2823 = vpop.f32.mrb[0].mxu0
    %v2824 = vadd.f32 %v2783, %v2823
    %v2825 = vpop.f32.mrb[0].mxu0
    %2826 = vdwg.mxu0
    %v2827 = vld [vmem:[#allocation11] sm:$0xff]
    %v2828 = vld [vmem:[#allocation11 + $0x8] sm:$0xff]
    %v2829 = vand.u32 %v2827, 1
    %v2830 = vand.u32 %v2828, 1
    %v2831 = vcvt.s32.f32 %v2829
    %v2832 = vcvt.s32.f32 %v2830
    %v2833 = vshra.s32 %v2827, 1
    %v2834 = vshra.s32 %v2828, 1
    %v2835 = vand.u32 %v2833, 1
    %v2836 = vand.u32 %v2834, 1
    %v2837 = vshra.s32 %v2827, 2
    %v2838 = vshra.s32 %v2828, 2
    %v2839 = vsub.f32 1.0, %v2831
    %v2840 = vsub.f32 1.0, %v2832
    %v2841 = vmul.f32 %v2839, -1e+32
    %v2842 = vmul.f32 %v2840, -1e+32
    %2844 = vset.pattern.permute.xlu0 0
    %2845 = vperm.xlu0 %2844, %v2841
    %v2846 = vpop.permute.xlu0 %2845
    %2849 = vset.pattern.permute.xlu0 0
    %2850 = vperm.xlu0 %2849, %v2842
    %v2851 = vpop.permute.xlu0 %2850
    %v2853 = vadd.f32 %v2821, %v2846
    %v2854 = vadd.f32 %v2824, %v2851
    %2855 = vmax.xlane.f32.xlu0 %v2853
    %v2856 = vpop.xlane.xlu0 %2855
    %2857 = vmax.xlane.f32.xlu0 %v2854
    %v2858 = vpop.xlane.xlu0 %2857
    %v2859 = vsub.f32 %v2853, %v2856
    %v2860 = vsub.f32 %v2854, %v2858
    %v2861 = vmul.f32 %v2859, 1.442695
    %v2862 = vpow.pop %v2861
    %v2863 = vmul.f32 %v2860, 1.442695
    %v2864 = vpow.pop %v2863
    %2865 = vadd.xlane.f32.xlu0 %v2862
    %v2866 = vpop.xlane.xlu0 %2865
    %2867 = vadd.xlane.f32.xlu0 %v2864
    %v2868 = vpop.xlane.xlu0 %2867
    %v2869 = vrcp.pop %v2866
    %v2870 = vrcp.pop %v2868
    %v2871 = vmul.f32 %v2862, %v2869
    %v2872 = vmul.f32 %v2864, %v2870
    %v2873 = vpack.c.bf16 %v2872, %v2871
    %v2875 = vunpack.c.l.b16 %v2873
    %v2876 = vunpack.c.h.b16 %v2873
    %v2877 = vpack.c.b16 %v2875, %v2875
    %v2878 = vpack.c.b16 %v2876, %v2876
    %2881 = vst [vmem:[#allocation13] sm:$0xf] %v2877
    %2882 = vst [vmem:[#allocation13 + $0x4] sm:$0xf] %v2878
    %v2883 = vlaneseq
    %v2884 = vand.u32 %v2883, 127
    %2885 = vset.pattern.permute.xlu0 0
    %2886 = vperm.xlu0 %2885, %v2837
    %v2887 = vpop.permute.xlu0 %2886
    %2888 = vset.pattern.permute.xlu0 0
    %2889 = vperm.xlu0 %2888, %v2838
    %v2890 = vpop.permute.xlu0 %2889
    %vm2891 = vcmp.eq.s32.totalorder %v2884, %v2887
    %vm2892 = vcmp.eq.s32.totalorder %v2884, %v2890
    %v2893 = vsel %vm2891, 1, 0
    %v2894 = vsel %vm2892, 1, 0
    %v2895 = vcvt.s32.f32 %v2893
    %v2896 = vcvt.s32.f32 %v2894
    %v2897 = vmul.f32 %v2853, %v2895
    %v2898 = vmul.f32 %v2854, %v2896
    %2899 = vadd.xlane.f32.xlu0 %v2897
    %v2900 = vpop.xlane.xlu0 %2899
    %2901 = vadd.xlane.f32.xlu0 %v2898
    %v2902 = vpop.xlane.xlu0 %2901
    %v2903 = vsub.f32 %v2900, %v2856
    %v2904 = vsub.f32 %v2902, %v2858
    %v2905 = vlog2.pop %v2866
    %v2906 = vmul.f32 %v2905, 0.6931472
    %v2907 = vlog2.pop %v2868
    %v2908 = vmul.f32 %v2907, 0.6931472
    %v2909 = vsub.f32 %v2903, %v2906
    %v2910 = vsub.f32 %v2904, %v2908
    %v2911 = vsub.f32 0.0, %v2909
    %v2912 = vsub.f32 0.0, %v2910
    %vm2913 = vcmp.gt.s32.totalorder %v2835, 0
    %vm2914 = vcmp.gt.s32.totalorder %v2836, 0
    %v2915 = vsel %vm2913, %v2911, 0.0
    %v2916 = vsel %vm2914, %v2912, 0.0
    %vm2917 = vcmask 7168
    %2918 = vst.msk [vmem:[#allocation14] sm:$0xff] %vm2917, %v2915
    %2919 = vst.msk [vmem:[#allocation14 + $0x8] sm:$0xff] %vm2917, %v2916
    // Predicated region
    $region50: #{bert_based_forward.1} parent=1 // pred_check
      _
    $region51: #{bert_based_forward.1} parent=1 // pred_check_branch
      %2921 = sbr.rel (0) target = $region53
    $region52: #{bert_based_forward.1} parent=1 // pred_region
      %s2923 = ssub.s32 128, 128
      %2924 = vsyncadd [#allocation4], %s2923
      %s2925 = sshll.u32 [#allocation13], 4
      %s2926 = int_to_ptr.vmem [resolvable:$true] %s2925
      %2931 = dma.vmem_to_hbm [thread:$0]  %s2926, 128, %s6, [#allocation4], 64, 64, 4
    $region53: #{bert_based_forward.1} parent=1 // pred_fallthru
      _
    // Predicated region
    $region54: #{bert_based_forward.1} parent=1 // pred_check
      _
    $region55: #{bert_based_forward.1} parent=1 // pred_check_branch
      %2933 = sbr.rel (0) target = $region57
    $region56: #{bert_based_forward.1} parent=1 // pred_region
      %s2935 = ssub.s32 256, 256
      %2936 = vsyncadd [#allocation15], %s2935
      %s2937 = sshll.u32 [#allocation14], 4
      %s2938 = int_to_ptr.vmem [resolvable:$true] %s2937
      %2943 = dma.vmem_to_hbm [thread:$0]  %s2938, 256, %s7, [#allocation15], 128, 128, 8
    $region57: #{bert_based_forward.1} parent=1 // pred_fallthru
      _
    // Predicated region
    $region58: #{bert_based_forward.1} parent=1 // pred_check
      _
    $region59: #{bert_based_forward.1} parent=1 // pred_check_branch
      %2945 = sbr.rel (0) target = $region61
    $region60: #{bert_based_forward.1} parent=1 // pred_region
      %2946 = dma.done [#allocation4], 128
    $region61: #{bert_based_forward.1} parent=1 // pred_fallthru
      _
    // Predicated region
    $region62: #{bert_based_forward.1} parent=1 // pred_check
      _
    $region63: #{bert_based_forward.1} parent=1 // pred_check_branch
      %2948 = sbr.rel (0) target = $region65
    $region64: #{bert_based_forward.1} parent=1 // pred_region
      %2949 = dma.done [#allocation15], 256
    $region65: #{bert_based_forward.1} parent=1 // pred_fallthru
      _
    %2950 = vsyncpa [#allocation3], 1
    %2951 = vsyncpa [#allocation6], 1
    %2952 = vsyncpa [#allocation9], 1
    %2953 = vsyncpa [#allocation12], 1
    %2954 = vsyncpa [#allocation4], 1
    %2955 = vsyncpa [#allocation15], 1

</llo_original>
